<compile_context>
chip_gen: v6e
topology: v6e:2x2x1
jax: 0.10.0
libtpu: 0.0.40
codegen_flags: <defaults>
</compile_context>

<pallas_src>
import jax
import jax.numpy as jnp
from jax import lax
from jax.experimental import pallas as pl
from jax.experimental.pallas import tpu as pltpu


# -----------------------------------------------------------------------------
# Fused kernel: tanh(embeddings) -> word_embeddings output
#               batched input projection (one big MXU matmul)
#               time-reversed LSTM recurrence -> thoughts output
# Gate order follows PyTorch: [i, f, g, o].
# -----------------------------------------------------------------------------
def _encoder_fused_kernel(x_ref, wih_ref, whh_ref, b_ref,
                          we_ref, th_ref, proj_sc):
    T, B, D = x_ref.shape
    H = whh_ref.shape[0]

    # 1) Elementwise tanh (EUP slot, free under the MXU work below);
    #    emit word_embeddings as the first output.
    x = jnp.tanh(x_ref[...])
    we_ref[...] = x.astype(we_ref.dtype)

    # 2) Input projection for ALL time steps at once:
    #    (T*B, D) @ (D, 4H) + bias  -> one MXU-friendly matmul, off the
    #    serial critical path.  (At production sizes cast operands to bf16
    #    with preferred_element_type=f32 on v6e/v7x.)
    proj = jnp.dot(x.reshape(T * B, D), wih_ref[...],
                   preferred_element_type=jnp.float32) + b_ref[...]
    proj_sc[...] = proj.reshape(T, B, 4 * H)

    # 3) Serial recurrence: only h @ W_hh + gate math per step.
    #    Time reversal is done by reading projection row (T-1-t).
    #    Fully unrolled (T is small and static) for scheduler visibility.
    def step(t, carry):
        h, c = carry
        gates = proj_sc[T - 1 - t] + jnp.dot(
            h, whh_ref[...], preferred_element_type=jnp.float32)
        # H is a multiple of 128 here -> these are free lane-aligned views.
        i_g = jax.nn.sigmoid(gates[:, 0 * H:1 * H])
        f_g = jax.nn.sigmoid(gates[:, 1 * H:2 * H])
        g_g = jnp.tanh(gates[:, 2 * H:3 * H])
        o_g = jax.nn.sigmoid(gates[:, 3 * H:4 * H])
        c_new = f_g * c + i_g * g_g
        h_new = o_g * jnp.tanh(c_new)
        return h_new, c_new

    h0 = jnp.zeros((B, H), jnp.float32)
    c0 = jnp.zeros((B, H), jnp.float32)
    h_last, _ = lax.fori_loop(0, T, step, (h0, c0), unroll=True)
    th_ref[...] = h_last.astype(th_ref.dtype)


# -----------------------------------------------------------------------------
# Encoder forward (glue: embedding gather + transpose; everything else fused)
# -----------------------------------------------------------------------------
def encoder_forward(sentences, params):
    emb = params["embedding"]
    w_ih_t = params["w_ih_t"]   # (D, 4H)  == weight_ih_l0.T
    w_hh_t = params["w_hh_t"]   # (H, 4H)  == weight_hh_l0.T
    bias = params["bias"]       # (1, 4H)  == b_ih + b_hh

    B, T = sentences.shape
    D = emb.shape[1]
    H = w_hh_t.shape[0]

    sentences_t = sentences.T                      # (T, B) == transpose(0, 1)
    # TODO(synk): fuse the gather into the kernel via
    # PrefetchScalarGridSpec(num_scalar_prefetch=1) + pl.Element row-gather on
    # the embedding table to avoid materializing the raw (T,B,D) in HBM.
    embd_raw = jnp.take(emb, sentences_t, axis=0)  # (T, B, D)

    # At these shapes everything fits in a single VMEM-resident block, so the
    # grid is trivially (1,).  At production sizes (D=620->640, H=1200->1280)
    # tile the 4H gate dimension, mark the constant weight specs
    # pipeline_mode=pl.Buffered(1) (or bf16-cast them) to stay under the v7x
    # 64 MiB VMEM ceiling, and shard the batch across TensorCores.
    word_embeddings, thoughts = pl.pallas_call(
        _encoder_fused_kernel,
        out_shape=(
            jax.ShapeDtypeStruct((T, B, D), jnp.float32),   # word_embeddings
            jax.ShapeDtypeStruct((B, H), jnp.float32),      # thoughts
        ),
        grid_spec=pltpu.PrefetchScalarGridSpec(
            num_scalar_prefetch=0,
            grid=(1,),
            in_specs=[
                pl.BlockSpec((T, B, D), lambda i: (0, 0, 0)),
                pl.BlockSpec((D, 4 * H), lambda i: (0, 0)),
                pl.BlockSpec((H, 4 * H), lambda i: (0, 0)),
                pl.BlockSpec((1, 4 * H), lambda i: (0, 0)),
            ],
            out_specs=[
                pl.BlockSpec((T, B, D), lambda i: (0, 0, 0)),
                pl.BlockSpec((B, H), lambda i: (0, 0)),
            ],
            scratch_shapes=[
                pltpu.VMEM((T, B, 4 * H), jnp.float32),  # precomputed x-proj
            ],
        ),
        compiler_params=pltpu.CompilerParams(
            dimension_semantics=("arbitrary",)),
    )(embd_raw, w_ih_t, w_hh_t, bias)

    return thoughts, word_embeddings


# -----------------------------------------------------------------------------
# Plain-JAX reference (for correctness check)
# -----------------------------------------------------------------------------
def encoder_reference(sentences, params):
    sentences_t = sentences.T
    we = jnp.tanh(jnp.take(params["embedding"], sentences_t, axis=0))
    rev = we[::-1]
    H = params["w_hh_t"].shape[0]
    B = sentences.shape[0]
    h = jnp.zeros((B, H), jnp.float32)
    c = jnp.zeros((B, H), jnp.float32)
    for t in range(rev.shape[0]):
        gates = rev[t] @ params["w_ih_t"] + h @ params["w_hh_t"] + params["bias"]
        i = jax.nn.sigmoid(gates[:, 0 * H:1 * H])
        f = jax.nn.sigmoid(gates[:, 1 * H:2 * H])
        g = jnp.tanh(gates[:, 2 * H:3 * H])
        o = jax.nn.sigmoid(gates[:, 3 * H:4 * H])
        c = f * c + i * g
        h = o * jnp.tanh(c)
    return h, we


if __name__ == "__main__":
    # Small shapes consistent with the module (word_size / thought_size scaled
    # down to TPU-friendly, 128-aligned sizes).
    VOCAB_SIZE = 64
    WORD_SIZE = 128     # stands in for 620 (pad to 640 in production)
    THOUGHT_SIZE = 128  # stands in for 1200 (pad to 1280 in production)
    BATCH = 8
    MAXLEN = 8

    key = jax.random.PRNGKey(0)
    k_emb, k_wih, k_whh, k_bih, k_bhh, k_sent = jax.random.split(key, 6)

    params = {
        "embedding": jax.random.normal(
            k_emb, (VOCAB_SIZE, WORD_SIZE), jnp.float32) * 0.1,
        # PyTorch weight_ih_l0 is (4H, D); we store its transpose for x @ W.
        "w_ih_t": jax.random.normal(
            k_wih, (WORD_SIZE, 4 * THOUGHT_SIZE), jnp.float32) * 0.05,
        "w_hh_t": jax.random.normal(
            k_whh, (THOUGHT_SIZE, 4 * THOUGHT_SIZE), jnp.float32) * 0.05,
        # bias = b_ih + b_hh, kept 2D (1, 4H) for broadcasting in-kernel.
        "bias": (jax.random.normal(k_bih, (1, 4 * THOUGHT_SIZE), jnp.float32)
                 + jax.random.normal(k_bhh, (1, 4 * THOUGHT_SIZE), jnp.float32)
                 ) * 0.05,
    }

    sentences = jax.random.randint(
        k_sent, (BATCH, MAXLEN), 0, VOCAB_SIZE, dtype=jnp.int32)

    thoughts, word_embeddings = encoder_forward(sentences, params)
    jax.block_until_ready((thoughts, word_embeddings))

    ref_thoughts, ref_we = encoder_reference(sentences, params)
    assert thoughts.shape == (BATCH, THOUGHT_SIZE)
    assert word_embeddings.shape == (MAXLEN, BATCH, WORD_SIZE)
    assert jnp.allclose(word_embeddings, ref_we, atol=1e-5, rtol=1e-5)
    assert jnp.allclose(thoughts, ref_thoughts, atol=2e-4, rtol=2e-4)

    print("KERNEL_OK")
</pallas_src>

<mosaic_0001>
module attributes {stable_mosaic.version = 11 : i64} {
  func.func @_encoder_fused_kernel(%arg0: i32, %arg1: memref<8x8x128xf32, #tpu.memory_space<vmem>>, %arg2: memref<128x512xf32, #tpu.memory_space<vmem>>, %arg3: memref<128x512xf32, #tpu.memory_space<vmem>>, %arg4: memref<1x512xf32, #tpu.memory_space<vmem>>, %arg5: memref<8x8x128xf32, #tpu.memory_space<vmem>>, %arg6: memref<8x128xf32, #tpu.memory_space<vmem>>, %arg7: memref<8x8x512xf32, #tpu.memory_space<vmem>>) attributes {dimension_semantics = [#tpu.dimension_semantics<arbitrary>], iteration_bounds = array<i64: 1>, scalar_prefetch = 0 : i64, scratch_operands = 1 : i64, tpu.core_type = #tpu.core_type<tc>, window_params = [{pipeline_mode = #tpu.pipeline_mode<synchronous>, transform_indices = @transform_0, window_bounds = array<i64: 8, 8, 128>}, {pipeline_mode = #tpu.pipeline_mode<synchronous>, transform_indices = @transform_1, window_bounds = array<i64: 128, 512>}, {pipeline_mode = #tpu.pipeline_mode<synchronous>, transform_indices = @transform_2, window_bounds = array<i64: 128, 512>}, {pipeline_mode = #tpu.pipeline_mode<synchronous>, transform_indices = @transform_3, window_bounds = array<i64: 1, 512>}, {pipeline_mode = #tpu.pipeline_mode<synchronous>, transform_indices = @transform_4, window_bounds = array<i64: 8, 8, 128>}, {pipeline_mode = #tpu.pipeline_mode<synchronous>, transform_indices = @transform_5, window_bounds = array<i64: 8, 128>}]} {
    %c0 = arith.constant 0 : index
    %c0_0 = arith.constant 0 : index
    %c0_1 = arith.constant 0 : index
    %0 = vector.load %arg1[%c0, %c0_0, %c0_1] : memref<8x8x128xf32, #tpu.memory_space<vmem>>, vector<8x8x128xf32>
    %1 = math.tanh %0 : vector<8x8x128xf32>
    %c0_2 = arith.constant 0 : index
    %c0_3 = arith.constant 0 : index
    %c0_4 = arith.constant 0 : index
    %2 = vector.load %arg5[%c0_2, %c0_3, %c0_4] : memref<8x8x128xf32, #tpu.memory_space<vmem>>, vector<8x8x128xf32>
    tpu.vector_store %arg5[%c0_2, %c0_3, %c0_4], %1 {strides = array<i32>} : memref<8x8x128xf32, #tpu.memory_space<vmem>>, vector<8x8x128xf32>,
    %3 = vector.shape_cast %1 : vector<8x8x128xf32> to vector<64x128xf32>
    %c0_5 = arith.constant 0 : index
    %c0_6 = arith.constant 0 : index
    %4 = vector.load %arg2[%c0_5, %c0_6] : memref<128x512xf32, #tpu.memory_space<vmem>>, vector<128x512xf32>
    %cst = arith.constant dense<0.000000e+00> : vector<64x512xf32>
    %5 = tpu.matmul %3, %4, %cst {dimension_numbers = #tpu.dot_dimension_numbers<[1], [0], [0], [1], [0, 0, 1, 1], [], []>} : vector<64x128xf32>, vector<128x512xf32>, vector<64x512xf32> -> vector<64x512xf32>
    %c0_7 = arith.constant 0 : index
    %c0_8 = arith.constant 0 : index
    %6 = vector.load %arg4[%c0_7, %c0_8] : memref<1x512xf32, #tpu.memory_space<vmem>>, vector<1x512xf32>
    %7 = vector.broadcast %6 : vector<1x512xf32> to vector<64x512xf32>
    %8 = arith.addf %5, %7 : vector<64x512xf32>
    %9 = vector.shape_cast %8 : vector<64x512xf32> to vector<8x8x512xf32>
    %c0_9 = arith.constant 0 : index
    %c0_10 = arith.constant 0 : index
    %c0_11 = arith.constant 0 : index
    %10 = vector.load %arg7[%c0_9, %c0_10, %c0_11] : memref<8x8x512xf32, #tpu.memory_space<vmem>>, vector<8x8x512xf32>
    tpu.vector_store %arg7[%c0_9, %c0_10, %c0_11], %9 {strides = array<i32>} : memref<8x8x512xf32, #tpu.memory_space<vmem>>, vector<8x8x512xf32>,
    %cst_12 = arith.constant 0.000000e+00 : f32
    %11 = vector.broadcast %cst_12 : f32 to vector<8x128xf32>
    %cst_13 = arith.constant 0.000000e+00 : f32
    %12 = vector.broadcast %cst_13 : f32 to vector<8x128xf32>
    %c0_i32 = arith.constant 0 : i32
    %c7_i32 = arith.constant 7 : i32
    %13 = arith.subi %c7_i32, %c0_i32 : i32
    %14 = arith.index_cast %13 : i32 to index
    %c0_14 = arith.constant 0 : index
    %c0_15 = arith.constant 0 : index
    %15 = vector.load %arg7[%14, %c0_14, %c0_15] : memref<8x8x512xf32, #tpu.memory_space<vmem>>, vector<1x8x512xf32>
    %16 = vector.shape_cast %15 : vector<1x8x512xf32> to vector<8x512xf32>
    %c0_16 = arith.constant 0 : index
    %c0_17 = arith.constant 0 : index
    %17 = vector.load %arg3[%c0_16, %c0_17] : memref<128x512xf32, #tpu.memory_space<vmem>>, vector<128x512xf32>
    %cst_18 = arith.constant dense<0.000000e+00> : vector<8x512xf32>
    %18 = tpu.matmul %11, %17, %cst_18 {dimension_numbers = #tpu.dot_dimension_numbers<[1], [0], [0], [1], [0, 0, 1, 1], [], []>} : vector<8x128xf32>, vector<128x512xf32>, vector<8x512xf32> -> vector<8x512xf32>
    %19 = arith.addf %16, %18 : vector<8x512xf32>
    %20 = vector.extract_strided_slice %19 {offsets = [0, 0], sizes = [8, 128], strides = [1, 1]} : vector<8x512xf32> to vector<8x128xf32>
    %21 = arith.negf %20 : vector<8x128xf32>
    %22 = math.exp %21 : vector<8x128xf32>
    %cst_19 = arith.constant 1.000000e+00 : f32
    %23 = vector.broadcast %cst_19 : f32 to vector<8x128xf32>
    %24 = arith.addf %23, %22 : vector<8x128xf32>
    %25 = arith.divf %23, %24 : vector<8x128xf32>
    %26 = vector.extract_strided_slice %19 {offsets = [0, 128], sizes = [8, 128], strides = [1, 1]} : vector<8x512xf32> to vector<8x128xf32>
    %27 = arith.negf %26 : vector<8x128xf32>
    %28 = math.exp %27 : vector<8x128xf32>
    %cst_20 = arith.constant 1.000000e+00 : f32
    %29 = vector.broadcast %cst_20 : f32 to vector<8x128xf32>
    %30 = arith.addf %29, %28 : vector<8x128xf32>
    %31 = arith.divf %29, %30 : vector<8x128xf32>
    %32 = vector.extract_strided_slice %19 {offsets = [0, 256], sizes = [8, 128], strides = [1, 1]} : vector<8x512xf32> to vector<8x128xf32>
    %33 = math.tanh %32 : vector<8x128xf32>
    %34 = vector.extract_strided_slice %19 {offsets = [0, 384], sizes = [8, 128], strides = [1, 1]} : vector<8x512xf32> to vector<8x128xf32>
    %35 = arith.negf %34 : vector<8x128xf32>
    %36 = math.exp %35 : vector<8x128xf32>
    %cst_21 = arith.constant 1.000000e+00 : f32
    %37 = vector.broadcast %cst_21 : f32 to vector<8x128xf32>
    %38 = arith.addf %37, %36 : vector<8x128xf32>
    %39 = arith.divf %37, %38 : vector<8x128xf32>
    %40 = arith.mulf %31, %12 : vector<8x128xf32>
    %41 = arith.mulf %25, %33 : vector<8x128xf32>
    %42 = arith.addf %40, %41 : vector<8x128xf32>
    %43 = math.tanh %42 : vector<8x128xf32>
    %44 = arith.mulf %39, %43 : vector<8x128xf32>
    %c1_i32 = arith.constant 1 : i32
    %c7_i32_22 = arith.constant 7 : i32
    %45 = arith.subi %c7_i32_22, %c1_i32 : i32
    %46 = arith.index_cast %45 : i32 to index
    %c0_23 = arith.constant 0 : index
    %c0_24 = arith.constant 0 : index
    %47 = vector.load %arg7[%46, %c0_23, %c0_24] : memref<8x8x512xf32, #tpu.memory_space<vmem>>, vector<1x8x512xf32>
    %48 = vector.shape_cast %47 : vector<1x8x512xf32> to vector<8x512xf32>
    %c0_25 = arith.constant 0 : index
    %c0_26 = arith.constant 0 : index
    %49 = vector.load %arg3[%c0_25, %c0_26] : memref<128x512xf32, #tpu.memory_space<vmem>>, vector<128x512xf32>
    %cst_27 = arith.constant dense<0.000000e+00> : vector<8x512xf32>
    %50 = tpu.matmul %44, %49, %cst_27 {dimension_numbers = #tpu.dot_dimension_numbers<[1], [0], [0], [1], [0, 0, 1, 1], [], []>} : vector<8x128xf32>, vector<128x512xf32>, vector<8x512xf32> -> vector<8x512xf32>
    %51 = arith.addf %48, %50 : vector<8x512xf32>
    %52 = vector.extract_strided_slice %51 {offsets = [0, 0], sizes = [8, 128], strides = [1, 1]} : vector<8x512xf32> to vector<8x128xf32>
    %53 = arith.negf %52 : vector<8x128xf32>
    %54 = math.exp %53 : vector<8x128xf32>
    %cst_28 = arith.constant 1.000000e+00 : f32
    %55 = vector.broadcast %cst_28 : f32 to vector<8x128xf32>
    %56 = arith.addf %55, %54 : vector<8x128xf32>
    %57 = arith.divf %55, %56 : vector<8x128xf32>
    %58 = vector.extract_strided_slice %51 {offsets = [0, 128], sizes = [8, 128], strides = [1, 1]} : vector<8x512xf32> to vector<8x128xf32>
    %59 = arith.negf %58 : vector<8x128xf32>
    %60 = math.exp %59 : vector<8x128xf32>
    %cst_29 = arith.constant 1.000000e+00 : f32
    %61 = vector.broadcast %cst_29 : f32 to vector<8x128xf32>
    %62 = arith.addf %61, %60 : vector<8x128xf32>
    %63 = arith.divf %61, %62 : vector<8x128xf32>
    %64 = vector.extract_strided_slice %51 {offsets = [0, 256], sizes = [8, 128], strides = [1, 1]} : vector<8x512xf32> to vector<8x128xf32>
    %65 = math.tanh %64 : vector<8x128xf32>
    %66 = vector.extract_strided_slice %51 {offsets = [0, 384], sizes = [8, 128], strides = [1, 1]} : vector<8x512xf32> to vector<8x128xf32>
    %67 = arith.negf %66 : vector<8x128xf32>
    %68 = math.exp %67 : vector<8x128xf32>
    %cst_30 = arith.constant 1.000000e+00 : f32
    %69 = vector.broadcast %cst_30 : f32 to vector<8x128xf32>
    %70 = arith.addf %69, %68 : vector<8x128xf32>
    %71 = arith.divf %69, %70 : vector<8x128xf32>
    %72 = arith.mulf %63, %42 : vector<8x128xf32>
    %73 = arith.mulf %57, %65 : vector<8x128xf32>
    %74 = arith.addf %72, %73 : vector<8x128xf32>
    %75 = math.tanh %74 : vector<8x128xf32>
    %76 = arith.mulf %71, %75 : vector<8x128xf32>
    %c2_i32 = arith.constant 2 : i32
    %c7_i32_31 = arith.constant 7 : i32
    %77 = arith.subi %c7_i32_31, %c2_i32 : i32
    %78 = arith.index_cast %77 : i32 to index
    %c0_32 = arith.constant 0 : index
    %c0_33 = arith.constant 0 : index
    %79 = vector.load %arg7[%78, %c0_32, %c0_33] : memref<8x8x512xf32, #tpu.memory_space<vmem>>, vector<1x8x512xf32>
    %80 = vector.shape_cast %79 : vector<1x8x512xf32> to vector<8x512xf32>
    %c0_34 = arith.constant 0 : index
    %c0_35 = arith.constant 0 : index
    %81 = vector.load %arg3[%c0_34, %c0_35] : memref<128x512xf32, #tpu.memory_space<vmem>>, vector<128x512xf32>
    %cst_36 = arith.constant dense<0.000000e+00> : vector<8x512xf32>
    %82 = tpu.matmul %76, %81, %cst_36 {dimension_numbers = #tpu.dot_dimension_numbers<[1], [0], [0], [1], [0, 0, 1, 1], [], []>} : vector<8x128xf32>, vector<128x512xf32>, vector<8x512xf32> -> vector<8x512xf32>
    %83 = arith.addf %80, %82 : vector<8x512xf32>
    %84 = vector.extract_strided_slice %83 {offsets = [0, 0], sizes = [8, 128], strides = [1, 1]} : vector<8x512xf32> to vector<8x128xf32>
    %85 = arith.negf %84 : vector<8x128xf32>
    %86 = math.exp %85 : vector<8x128xf32>
    %cst_37 = arith.constant 1.000000e+00 : f32
    %87 = vector.broadcast %cst_37 : f32 to vector<8x128xf32>
    %88 = arith.addf %87, %86 : vector<8x128xf32>
    %89 = arith.divf %87, %88 : vector<8x128xf32>
    %90 = vector.extract_strided_slice %83 {offsets = [0, 128], sizes = [8, 128], strides = [1, 1]} : vector<8x512xf32> to vector<8x128xf32>
    %91 = arith.negf %90 : vector<8x128xf32>
    %92 = math.exp %91 : vector<8x128xf32>
    %cst_38 = arith.constant 1.000000e+00 : f32
    %93 = vector.broadcast %cst_38 : f32 to vector<8x128xf32>
    %94 = arith.addf %93, %92 : vector<8x128xf32>
    %95 = arith.divf %93, %94 : vector<8x128xf32>
    %96 = vector.extract_strided_slice %83 {offsets = [0, 256], sizes = [8, 128], strides = [1, 1]} : vector<8x512xf32> to vector<8x128xf32>
    %97 = math.tanh %96 : vector<8x128xf32>
    %98 = vector.extract_strided_slice %83 {offsets = [0, 384], sizes = [8, 128], strides = [1, 1]} : vector<8x512xf32> to vector<8x128xf32>
    %99 = arith.negf %98 : vector<8x128xf32>
    %100 = math.exp %99 : vector<8x128xf32>
    %cst_39 = arith.constant 1.000000e+00 : f32
    %101 = vector.broadcast %cst_39 : f32 to vector<8x128xf32>
    %102 = arith.addf %101, %100 : vector<8x128xf32>
    %103 = arith.divf %101, %102 : vector<8x128xf32>
    %104 = arith.mulf %95, %74 : vector<8x128xf32>
    %105 = arith.mulf %89, %97 : vector<8x128xf32>
    %106 = arith.addf %104, %105 : vector<8x128xf32>
    %107 = math.tanh %106 : vector<8x128xf32>
    %108 = arith.mulf %103, %107 : vector<8x128xf32>
    %c3_i32 = arith.constant 3 : i32
    %c7_i32_40 = arith.constant 7 : i32
    %109 = arith.subi %c7_i32_40, %c3_i32 : i32
    %110 = arith.index_cast %109 : i32 to index
    %c0_41 = arith.constant 0 : index
    %c0_42 = arith.constant 0 : index
    %111 = vector.load %arg7[%110, %c0_41, %c0_42] : memref<8x8x512xf32, #tpu.memory_space<vmem>>, vector<1x8x512xf32>
    %112 = vector.shape_cast %111 : vector<1x8x512xf32> to vector<8x512xf32>
    %c0_43 = arith.constant 0 : index
    %c0_44 = arith.constant 0 : index
    %113 = vector.load %arg3[%c0_43, %c0_44] : memref<128x512xf32, #tpu.memory_space<vmem>>, vector<128x512xf32>
    %cst_45 = arith.constant dense<0.000000e+00> : vector<8x512xf32>
    %114 = tpu.matmul %108, %113, %cst_45 {dimension_numbers = #tpu.dot_dimension_numbers<[1], [0], [0], [1], [0, 0, 1, 1], [], []>} : vector<8x128xf32>, vector<128x512xf32>, vector<8x512xf32> -> vector<8x512xf32>
    %115 = arith.addf %112, %114 : vector<8x512xf32>
    %116 = vector.extract_strided_slice %115 {offsets = [0, 0], sizes = [8, 128], strides = [1, 1]} : vector<8x512xf32> to vector<8x128xf32>
    %117 = arith.negf %116 : vector<8x128xf32>
    %118 = math.exp %117 : vector<8x128xf32>
    %cst_46 = arith.constant 1.000000e+00 : f32
    %119 = vector.broadcast %cst_46 : f32 to vector<8x128xf32>
    %120 = arith.addf %119, %118 : vector<8x128xf32>
    %121 = arith.divf %119, %120 : vector<8x128xf32>
    %122 = vector.extract_strided_slice %115 {offsets = [0, 128], sizes = [8, 128], strides = [1, 1]} : vector<8x512xf32> to vector<8x128xf32>
    %123 = arith.negf %122 : vector<8x128xf32>
    %124 = math.exp %123 : vector<8x128xf32>
    %cst_47 = arith.constant 1.000000e+00 : f32
    %125 = vector.broadcast %cst_47 : f32 to vector<8x128xf32>
    %126 = arith.addf %125, %124 : vector<8x128xf32>
    %127 = arith.divf %125, %126 : vector<8x128xf32>
    %128 = vector.extract_strided_slice %115 {offsets = [0, 256], sizes = [8, 128], strides = [1, 1]} : vector<8x512xf32> to vector<8x128xf32>
    %129 = math.tanh %128 : vector<8x128xf32>
    %130 = vector.extract_strided_slice %115 {offsets = [0, 384], sizes = [8, 128], strides = [1, 1]} : vector<8x512xf32> to vector<8x128xf32>
    %131 = arith.negf %130 : vector<8x128xf32>
    %132 = math.exp %131 : vector<8x128xf32>
    %cst_48 = arith.constant 1.000000e+00 : f32
    %133 = vector.broadcast %cst_48 : f32 to vector<8x128xf32>
    %134 = arith.addf %133, %132 : vector<8x128xf32>
    %135 = arith.divf %133, %134 : vector<8x128xf32>
    %136 = arith.mulf %127, %106 : vector<8x128xf32>
    %137 = arith.mulf %121, %129 : vector<8x128xf32>
    %138 = arith.addf %136, %137 : vector<8x128xf32>
    %139 = math.tanh %138 : vector<8x128xf32>
    %140 = arith.mulf %135, %139 : vector<8x128xf32>
    %c4_i32 = arith.constant 4 : i32
    %c7_i32_49 = arith.constant 7 : i32
    %141 = arith.subi %c7_i32_49, %c4_i32 : i32
    %142 = arith.index_cast %141 : i32 to index
    %c0_50 = arith.constant 0 : index
    %c0_51 = arith.constant 0 : index
    %143 = vector.load %arg7[%142, %c0_50, %c0_51] : memref<8x8x512xf32, #tpu.memory_space<vmem>>, vector<1x8x512xf32>
    %144 = vector.shape_cast %143 : vector<1x8x512xf32> to vector<8x512xf32>
    %c0_52 = arith.constant 0 : index
    %c0_53 = arith.constant 0 : index
    %145 = vector.load %arg3[%c0_52, %c0_53] : memref<128x512xf32, #tpu.memory_space<vmem>>, vector<128x512xf32>
    %cst_54 = arith.constant dense<0.000000e+00> : vector<8x512xf32>
    %146 = tpu.matmul %140, %145, %cst_54 {dimension_numbers = #tpu.dot_dimension_numbers<[1], [0], [0], [1], [0, 0, 1, 1], [], []>} : vector<8x128xf32>, vector<128x512xf32>, vector<8x512xf32> -> vector<8x512xf32>
    %147 = arith.addf %144, %146 : vector<8x512xf32>
    %148 = vector.extract_strided_slice %147 {offsets = [0, 0], sizes = [8, 128], strides = [1, 1]} : vector<8x512xf32> to vector<8x128xf32>
    %149 = arith.negf %148 : vector<8x128xf32>
    %150 = math.exp %149 : vector<8x128xf32>
    %cst_55 = arith.constant 1.000000e+00 : f32
    %151 = vector.broadcast %cst_55 : f32 to vector<8x128xf32>
    %152 = arith.addf %151, %150 : vector<8x128xf32>
    %153 = arith.divf %151, %152 : vector<8x128xf32>
    %154 = vector.extract_strided_slice %147 {offsets = [0, 128], sizes = [8, 128], strides = [1, 1]} : vector<8x512xf32> to vector<8x128xf32>
    %155 = arith.negf %154 : vector<8x128xf32>
    %156 = math.exp %155 : vector<8x128xf32>
    %cst_56 = arith.constant 1.000000e+00 : f32
    %157 = vector.broadcast %cst_56 : f32 to vector<8x128xf32>
    %158 = arith.addf %157, %156 : vector<8x128xf32>
    %159 = arith.divf %157, %158 : vector<8x128xf32>
    %160 = vector.extract_strided_slice %147 {offsets = [0, 256], sizes = [8, 128], strides = [1, 1]} : vector<8x512xf32> to vector<8x128xf32>
    %161 = math.tanh %160 : vector<8x128xf32>
    %162 = vector.extract_strided_slice %147 {offsets = [0, 384], sizes = [8, 128], strides = [1, 1]} : vector<8x512xf32> to vector<8x128xf32>
    %163 = arith.negf %162 : vector<8x128xf32>
    %164 = math.exp %163 : vector<8x128xf32>
    %cst_57 = arith.constant 1.000000e+00 : f32
    %165 = vector.broadcast %cst_57 : f32 to vector<8x128xf32>
    %166 = arith.addf %165, %164 : vector<8x128xf32>
    %167 = arith.divf %165, %166 : vector<8x128xf32>
    %168 = arith.mulf %159, %138 : vector<8x128xf32>
    %169 = arith.mulf %153, %161 : vector<8x128xf32>
    %170 = arith.addf %168, %169 : vector<8x128xf32>
    %171 = math.tanh %170 : vector<8x128xf32>
    %172 = arith.mulf %167, %171 : vector<8x128xf32>
    %c5_i32 = arith.constant 5 : i32
    %c7_i32_58 = arith.constant 7 : i32
    %173 = arith.subi %c7_i32_58, %c5_i32 : i32
    %174 = arith.index_cast %173 : i32 to index
    %c0_59 = arith.constant 0 : index
    %c0_60 = arith.constant 0 : index
    %175 = vector.load %arg7[%174, %c0_59, %c0_60] : memref<8x8x512xf32, #tpu.memory_space<vmem>>, vector<1x8x512xf32>
    %176 = vector.shape_cast %175 : vector<1x8x512xf32> to vector<8x512xf32>
    %c0_61 = arith.constant 0 : index
    %c0_62 = arith.constant 0 : index
    %177 = vector.load %arg3[%c0_61, %c0_62] : memref<128x512xf32, #tpu.memory_space<vmem>>, vector<128x512xf32>
    %cst_63 = arith.constant dense<0.000000e+00> : vector<8x512xf32>
    %178 = tpu.matmul %172, %177, %cst_63 {dimension_numbers = #tpu.dot_dimension_numbers<[1], [0], [0], [1], [0, 0, 1, 1], [], []>} : vector<8x128xf32>, vector<128x512xf32>, vector<8x512xf32> -> vector<8x512xf32>
    %179 = arith.addf %176, %178 : vector<8x512xf32>
    %180 = vector.extract_strided_slice %179 {offsets = [0, 0], sizes = [8, 128], strides = [1, 1]} : vector<8x512xf32> to vector<8x128xf32>
    %181 = arith.negf %180 : vector<8x128xf32>
    %182 = math.exp %181 : vector<8x128xf32>
    %cst_64 = arith.constant 1.000000e+00 : f32
    %183 = vector.broadcast %cst_64 : f32 to vector<8x128xf32>
    %184 = arith.addf %183, %182 : vector<8x128xf32>
    %185 = arith.divf %183, %184 : vector<8x128xf32>
    %186 = vector.extract_strided_slice %179 {offsets = [0, 128], sizes = [8, 128], strides = [1, 1]} : vector<8x512xf32> to vector<8x128xf32>
    %187 = arith.negf %186 : vector<8x128xf32>
    %188 = math.exp %187 : vector<8x128xf32>
    %cst_65 = arith.constant 1.000000e+00 : f32
    %189 = vector.broadcast %cst_65 : f32 to vector<8x128xf32>
    %190 = arith.addf %189, %188 : vector<8x128xf32>
    %191 = arith.divf %189, %190 : vector<8x128xf32>
    %192 = vector.extract_strided_slice %179 {offsets = [0, 256], sizes = [8, 128], strides = [1, 1]} : vector<8x512xf32> to vector<8x128xf32>
    %193 = math.tanh %192 : vector<8x128xf32>
    %194 = vector.extract_strided_slice %179 {offsets = [0, 384], sizes = [8, 128], strides = [1, 1]} : vector<8x512xf32> to vector<8x128xf32>
    %195 = arith.negf %194 : vector<8x128xf32>
    %196 = math.exp %195 : vector<8x128xf32>
    %cst_66 = arith.constant 1.000000e+00 : f32
    %197 = vector.broadcast %cst_66 : f32 to vector<8x128xf32>
    %198 = arith.addf %197, %196 : vector<8x128xf32>
    %199 = arith.divf %197, %198 : vector<8x128xf32>
    %200 = arith.mulf %191, %170 : vector<8x128xf32>
    %201 = arith.mulf %185, %193 : vector<8x128xf32>
    %202 = arith.addf %200, %201 : vector<8x128xf32>
    %203 = math.tanh %202 : vector<8x128xf32>
    %204 = arith.mulf %199, %203 : vector<8x128xf32>
    %c6_i32 = arith.constant 6 : i32
    %c7_i32_67 = arith.constant 7 : i32
    %205 = arith.subi %c7_i32_67, %c6_i32 : i32
    %206 = arith.index_cast %205 : i32 to index
    %c0_68 = arith.constant 0 : index
    %c0_69 = arith.constant 0 : index
    %207 = vector.load %arg7[%206, %c0_68, %c0_69] : memref<8x8x512xf32, #tpu.memory_space<vmem>>, vector<1x8x512xf32>
    %208 = vector.shape_cast %207 : vector<1x8x512xf32> to vector<8x512xf32>
    %c0_70 = arith.constant 0 : index
    %c0_71 = arith.constant 0 : index
    %209 = vector.load %arg3[%c0_70, %c0_71] : memref<128x512xf32, #tpu.memory_space<vmem>>, vector<128x512xf32>
    %cst_72 = arith.constant dense<0.000000e+00> : vector<8x512xf32>
    %210 = tpu.matmul %204, %209, %cst_72 {dimension_numbers = #tpu.dot_dimension_numbers<[1], [0], [0], [1], [0, 0, 1, 1], [], []>} : vector<8x128xf32>, vector<128x512xf32>, vector<8x512xf32> -> vector<8x512xf32>
    %211 = arith.addf %208, %210 : vector<8x512xf32>
    %212 = vector.extract_strided_slice %211 {offsets = [0, 0], sizes = [8, 128], strides = [1, 1]} : vector<8x512xf32> to vector<8x128xf32>
    %213 = arith.negf %212 : vector<8x128xf32>
    %214 = math.exp %213 : vector<8x128xf32>
    %cst_73 = arith.constant 1.000000e+00 : f32
    %215 = vector.broadcast %cst_73 : f32 to vector<8x128xf32>
    %216 = arith.addf %215, %214 : vector<8x128xf32>
    %217 = arith.divf %215, %216 : vector<8x128xf32>
    %218 = vector.extract_strided_slice %211 {offsets = [0, 128], sizes = [8, 128], strides = [1, 1]} : vector<8x512xf32> to vector<8x128xf32>
    %219 = arith.negf %218 : vector<8x128xf32>
    %220 = math.exp %219 : vector<8x128xf32>
    %cst_74 = arith.constant 1.000000e+00 : f32
    %221 = vector.broadcast %cst_74 : f32 to vector<8x128xf32>
    %222 = arith.addf %221, %220 : vector<8x128xf32>
    %223 = arith.divf %221, %222 : vector<8x128xf32>
    %224 = vector.extract_strided_slice %211 {offsets = [0, 256], sizes = [8, 128], strides = [1, 1]} : vector<8x512xf32> to vector<8x128xf32>
    %225 = math.tanh %224 : vector<8x128xf32>
    %226 = vector.extract_strided_slice %211 {offsets = [0, 384], sizes = [8, 128], strides = [1, 1]} : vector<8x512xf32> to vector<8x128xf32>
    %227 = arith.negf %226 : vector<8x128xf32>
    %228 = math.exp %227 : vector<8x128xf32>
    %cst_75 = arith.constant 1.000000e+00 : f32
    %229 = vector.broadcast %cst_75 : f32 to vector<8x128xf32>
    %230 = arith.addf %229, %228 : vector<8x128xf32>
    %231 = arith.divf %229, %230 : vector<8x128xf32>
    %232 = arith.mulf %223, %202 : vector<8x128xf32>
    %233 = arith.mulf %217, %225 : vector<8x128xf32>
    %234 = arith.addf %232, %233 : vector<8x128xf32>
    %235 = math.tanh %234 : vector<8x128xf32>
    %236 = arith.mulf %231, %235 : vector<8x128xf32>
    %c7_i32_76 = arith.constant 7 : i32
    %c7_i32_77 = arith.constant 7 : i32
    %237 = arith.subi %c7_i32_77, %c7_i32_76 : i32
    %238 = arith.index_cast %237 : i32 to index
    %c0_78 = arith.constant 0 : index
    %c0_79 = arith.constant 0 : index
    %239 = vector.load %arg7[%238, %c0_78, %c0_79] : memref<8x8x512xf32, #tpu.memory_space<vmem>>, vector<1x8x512xf32>
    %240 = vector.shape_cast %239 : vector<1x8x512xf32> to vector<8x512xf32>
    %c0_80 = arith.constant 0 : index
    %c0_81 = arith.constant 0 : index
    %241 = vector.load %arg3[%c0_80, %c0_81] : memref<128x512xf32, #tpu.memory_space<vmem>>, vector<128x512xf32>
    %cst_82 = arith.constant dense<0.000000e+00> : vector<8x512xf32>
    %242 = tpu.matmul %236, %241, %cst_82 {dimension_numbers = #tpu.dot_dimension_numbers<[1], [0], [0], [1], [0, 0, 1, 1], [], []>} : vector<8x128xf32>, vector<128x512xf32>, vector<8x512xf32> -> vector<8x512xf32>
    %243 = arith.addf %240, %242 : vector<8x512xf32>
    %244 = vector.extract_strided_slice %243 {offsets = [0, 0], sizes = [8, 128], strides = [1, 1]} : vector<8x512xf32> to vector<8x128xf32>
    %245 = arith.negf %244 : vector<8x128xf32>
    %246 = math.exp %245 : vector<8x128xf32>
    %cst_83 = arith.constant 1.000000e+00 : f32
    %247 = vector.broadcast %cst_83 : f32 to vector<8x128xf32>
    %248 = arith.addf %247, %246 : vector<8x128xf32>
    %249 = arith.divf %247, %248 : vector<8x128xf32>
    %250 = vector.extract_strided_slice %243 {offsets = [0, 128], sizes = [8, 128], strides = [1, 1]} : vector<8x512xf32> to vector<8x128xf32>
    %251 = arith.negf %250 : vector<8x128xf32>
    %252 = math.exp %251 : vector<8x128xf32>
    %cst_84 = arith.constant 1.000000e+00 : f32
    %253 = vector.broadcast %cst_84 : f32 to vector<8x128xf32>
    %254 = arith.addf %253, %252 : vector<8x128xf32>
    %255 = arith.divf %253, %254 : vector<8x128xf32>
    %256 = vector.extract_strided_slice %243 {offsets = [0, 256], sizes = [8, 128], strides = [1, 1]} : vector<8x512xf32> to vector<8x128xf32>
    %257 = math.tanh %256 : vector<8x128xf32>
    %258 = vector.extract_strided_slice %243 {offsets = [0, 384], sizes = [8, 128], strides = [1, 1]} : vector<8x512xf32> to vector<8x128xf32>
    %259 = arith.negf %258 : vector<8x128xf32>
    %260 = math.exp %259 : vector<8x128xf32>
    %cst_85 = arith.constant 1.000000e+00 : f32
    %261 = vector.broadcast %cst_85 : f32 to vector<8x128xf32>
    %262 = arith.addf %261, %260 : vector<8x128xf32>
    %263 = arith.divf %261, %262 : vector<8x128xf32>
    %264 = arith.mulf %255, %234 : vector<8x128xf32>
    %265 = arith.mulf %249, %257 : vector<8x128xf32>
    %266 = arith.addf %264, %265 : vector<8x128xf32>
    %267 = math.tanh %266 : vector<8x128xf32>
    %268 = arith.mulf %263, %267 : vector<8x128xf32>
    %c8_i32 = arith.constant 8 : i32
    %c0_86 = arith.constant 0 : index
    %c0_87 = arith.constant 0 : index
    %269 = vector.load %arg6[%c0_86, %c0_87] : memref<8x128xf32, #tpu.memory_space<vmem>>, vector<8x128xf32>
    tpu.vector_store %arg6[%c0_86, %c0_87], %268 {strides = array<i32>} : memref<8x128xf32, #tpu.memory_space<vmem>>, vector<8x128xf32>,
    return
  }
  func.func @transform_0(%arg0: i32) -> (i32, i32, i32) {
    %c0_i32 = arith.constant 0 : i32
    %c0_i32_0 = arith.constant 0 : i32
    %c0_i32_1 = arith.constant 0 : i32
    %c0_i32_2 = arith.constant 0 : i32
    return %c0_i32, %c0_i32_0, %c0_i32_1 : i32, i32, i32
  }
  func.func @transform_1(%arg0: i32) -> (i32, i32) {
    %c0_i32 = arith.constant 0 : i32
    %c0_i32_0 = arith.constant 0 : i32
    %c0_i32_1 = arith.constant 0 : i32
    return %c0_i32, %c0_i32_0 : i32, i32
  }
  func.func @transform_2(%arg0: i32) -> (i32, i32) {
    %c0_i32 = arith.constant 0 : i32
    %c0_i32_0 = arith.constant 0 : i32
    %c0_i32_1 = arith.constant 0 : i32
    return %c0_i32, %c0_i32_0 : i32, i32
  }
  func.func @transform_3(%arg0: i32) -> (i32, i32) {
    %c0_i32 = arith.constant 0 : i32
    %c0_i32_0 = arith.constant 0 : i32
    %c0_i32_1 = arith.constant 0 : i32
    return %c0_i32, %c0_i32_0 : i32, i32
  }
  func.func @transform_4(%arg0: i32) -> (i32, i32, i32) {
    %c0_i32 = arith.constant 0 : i32
    %c0_i32_0 = arith.constant 0 : i32
    %c0_i32_1 = arith.constant 0 : i32
    %c0_i32_2 = arith.constant 0 : i32
    return %c0_i32, %c0_i32_0, %c0_i32_1 : i32, i32, i32
  }
  func.func @transform_5(%arg0: i32) -> (i32, i32) {
    %c0_i32 = arith.constant 0 : i32
    %c0_i32_0 = arith.constant 0 : i32
    %c0_i32_1 = arith.constant 0 : i32
    return %c0_i32, %c0_i32_0 : i32, i32
  }
}

</mosaic_0001>

<llo_original>
// kernel: tpu_custom_call.1
$region0: #{tpu_custom_call.1}
  #allocation0 [shape = 'u32[]', space=smem, size = 0x4, offset = 0x4, fixed_abs, tag = 'smem constant byte address 0x4 - core index']
  #allocation1 [shape = 'u32[144,128]{1,0:T(1,128)}', space=vmem, size = 0x12000, scoped, tag = 'internal scratch']
  #allocation2 [shape = 'f32[8,8,512]{2,1,0:T(8,128)}', space=vmem, size = 0x20000, scoped, tag = 'scratch operand']
  %s0 = inlined_call_operand.hbm [shape: f32[8,8,128], index: 0, kind: input, shape index: {}]
  %s1 = inlined_call_operand.hbm [shape: f32[128,512], index: 1, kind: input, shape index: {}]
  %s2 = inlined_call_operand.hbm [shape: f32[128,512], index: 2, kind: input, shape index: {}]
  %s3 = inlined_call_operand.vmem [shape: f32[1,512], index: 3, kind: input, shape index: {}]
  %s4 = inlined_call_operand.hbm [shape: f32[8,8,128], index: 4, kind: output, shape index: {0}]
  %s5 = inlined_call_operand.hbm [shape: f32[8,128], index: 5, kind: output, shape index: {1}]
  %6 = xla_tuple %s4, %s5
  %s7 = sld [smem:[#allocation0]]
  $region46: #{tpu_custom_call.1} parent=0
    _
  %s9 = ssub.s32 1, %s7
  %s10 = scalar_select 0, %s9, %s7
  $region1: #{tpu_custom_call.1} parent=0
    #allocation3 [shape = 'u8[32768]{0}', space=vmem, size = 0x8000, scoped, tag = 'input window, operand 0, single buffered']
    #allocation4 [shape = 's32[1]{0}', space=sflag, size = 0x4, scoped, tag = 'scoped memory for tpu_custom_call.1']
    #allocation5 [shape = 's32[1]{0}', space=sflag, size = 0x4, scoped, tag = 'scoped memory for tpu_custom_call.1']
    #allocation6 [shape = 'u8[262144]{0}', space=vmem, size = 0x40000, scoped, tag = 'input window, operand 1, single buffered']
    #allocation7 [shape = 's32[1]{0}', space=sflag, size = 0x4, scoped, tag = 'scoped memory for tpu_custom_call.1']
    #allocation8 [shape = 'u8[262144]{0}', space=vmem, size = 0x40000, scoped, tag = 'input window, operand 2, single buffered']
    #allocation9 [shape = 'u8[32768]{0}', space=vmem, size = 0x8000, scoped, tag = 'output window, operand 0, single buffered']
    #allocation10 [shape = 'u8[4096]{0}', space=vmem, size = 0x1000, scoped, tag = 'output window, operand 1, single buffered']
    #allocation11 [shape = 's32[1]{0}', space=sflag, size = 0x4, scoped, tag = 'scoped memory for tpu_custom_call.1']
    %11 = vsyncpa [#allocation4], 0
    %12 = vsyncpa [#allocation7], 0
    %13 = vsyncpa [#allocation5], 0
    %14 = vsyncpa [#allocation11], 0
    // Predicated region
    $region2: #{tpu_custom_call.1} parent=1 // pred_check
      _
    $region3: #{tpu_custom_call.1} parent=1 // pred_check_branch
      %16 = sbr.rel (0) target = $region5
    $region4: #{tpu_custom_call.1} parent=1 // pred_region
      %s18 = ssub.s32 1024, 1024
      %19 = vsyncadd [#allocation4], %s18
      %s20 = sshll.u32 [#allocation3], 4
      %s21 = int_to_ptr.vmem [resolvable:$true] %s20
      %26 = dma.hbm_to_vmem [thread:$0]  %s0, 1024, %s21, [#allocation4], 128, 128, 8
    $region5: #{tpu_custom_call.1} parent=1 // pred_fallthru
      _
    // Predicated region
    $region6: #{tpu_custom_call.1} parent=1 // pred_check
      _
    $region7: #{tpu_custom_call.1} parent=1 // pred_check_branch
      %28 = sbr.rel (0) target = $region9
    $region8: #{tpu_custom_call.1} parent=1 // pred_region
      %s30 = ssub.s32 8192, 8192
      %31 = vsyncadd [#allocation7], %s30
      %s32 = sshll.u32 [#allocation6], 4
      %s33 = int_to_ptr.vmem [resolvable:$true] %s32
      %38 = dma.hbm_to_vmem [thread:$0]  %s1, 8192, %s33, [#allocation7], 512, 512, 32
    $region9: #{tpu_custom_call.1} parent=1 // pred_fallthru
      _
    // Predicated region
    $region10: #{tpu_custom_call.1} parent=1 // pred_check
      _
    $region11: #{tpu_custom_call.1} parent=1 // pred_check_branch
      %40 = sbr.rel (0) target = $region13
    $region12: #{tpu_custom_call.1} parent=1 // pred_region
      %s42 = ssub.s32 8192, 8192
      %43 = vsyncadd [#allocation7], %s42
      %s44 = sshll.u32 [#allocation8], 4
      %s45 = int_to_ptr.vmem [resolvable:$true] %s44
      %50 = dma.hbm_to_vmem [thread:$0]  %s2, 8192, %s45, [#allocation7], 512, 512, 32
    $region13: #{tpu_custom_call.1} parent=1 // pred_fallthru
      _
    // Predicated region
    $region14: #{tpu_custom_call.1} parent=1 // pred_check
      _
    $region15: #{tpu_custom_call.1} parent=1 // pred_check_branch
      %52 = sbr.rel (0) target = $region17
    $region16: #{tpu_custom_call.1} parent=1 // pred_region
      _
    $region17: #{tpu_custom_call.1} parent=1 // pred_fallthru
      _
    // Predicated region
    $region18: #{tpu_custom_call.1} parent=1 // pred_check
      _
    $region19: #{tpu_custom_call.1} parent=1 // pred_check_branch
      %54 = sbr.rel (0) target = $region21
    $region20: #{tpu_custom_call.1} parent=1 // pred_region
      %55 = dma.done [#allocation4], 1024
    $region21: #{tpu_custom_call.1} parent=1 // pred_fallthru
      _
    // Predicated region
    $region22: #{tpu_custom_call.1} parent=1 // pred_check
      _
    $region23: #{tpu_custom_call.1} parent=1 // pred_check_branch
      %57 = sbr.rel (0) target = $region25
    $region24: #{tpu_custom_call.1} parent=1 // pred_region
      %58 = dma.done [#allocation7], 8192
    $region25: #{tpu_custom_call.1} parent=1 // pred_fallthru
      _
    // Predicated region
    $region26: #{tpu_custom_call.1} parent=1 // pred_check
      _
    $region27: #{tpu_custom_call.1} parent=1 // pred_check_branch
      %60 = sbr.rel (0) target = $region29
    $region28: #{tpu_custom_call.1} parent=1 // pred_region
      %61 = dma.done [#allocation7], 8192
    $region29: #{tpu_custom_call.1} parent=1 // pred_fallthru
      _
    %v62 = vld [vmem:[#allocation3] sm:$0xff]
    %v63 = vld [vmem:[#allocation3 + $0x8] sm:$0xff]
    %v64 = vld [vmem:[#allocation3 + $0x10] sm:$0xff]
    %v65 = vld [vmem:[#allocation3 + $0x18] sm:$0xff]
    %v66 = vld [vmem:[#allocation3 + $0x20] sm:$0xff]
    %v67 = vld [vmem:[#allocation3 + $0x28] sm:$0xff]
    %v68 = vld [vmem:[#allocation3 + $0x30] sm:$0xff]
    %v69 = vld [vmem:[#allocation3 + $0x38] sm:$0xff]
    %v70 = vtanh.pop %v62
    %v71 = vtanh.pop %v63
    %v72 = vtanh.pop %v64
    %v73 = vtanh.pop %v65
    %v74 = vtanh.pop %v66
    %v75 = vtanh.pop %v67
    %v76 = vtanh.pop %v68
    %v77 = vtanh.pop %v69
    %78 = vst [vmem:[#allocation9] sm:$0xff] %v70
    %79 = vst [vmem:[#allocation9 + $0x8] sm:$0xff] %v71
    %80 = vst [vmem:[#allocation9 + $0x10] sm:$0xff] %v72
    %81 = vst [vmem:[#allocation9 + $0x18] sm:$0xff] %v73
    %82 = vst [vmem:[#allocation9 + $0x20] sm:$0xff] %v74
    %83 = vst [vmem:[#allocation9 + $0x28] sm:$0xff] %v75
    %84 = vst [vmem:[#allocation9 + $0x30] sm:$0xff] %v76
    %85 = vst [vmem:[#allocation9 + $0x38] sm:$0xff] %v77
    %v86 = vld [vmem:[#allocation6] sm:$0xff]
    %v87 = vld [vmem:[#allocation6 + $0x8] sm:$0xff]
    %v88 = vld [vmem:[#allocation6 + $0x10] sm:$0xff]
    %v89 = vld [vmem:[#allocation6 + $0x18] sm:$0xff]
    %v90 = vld [vmem:[#allocation6 + $0x20] sm:$0xff]
    %v91 = vld [vmem:[#allocation6 + $0x28] sm:$0xff]
    %v92 = vld [vmem:[#allocation6 + $0x30] sm:$0xff]
    %v93 = vld [vmem:[#allocation6 + $0x38] sm:$0xff]
    %v94 = vld [vmem:[#allocation6 + $0x40] sm:$0xff]
    %v95 = vld [vmem:[#allocation6 + $0x48] sm:$0xff]
    %v96 = vld [vmem:[#allocation6 + $0x50] sm:$0xff]
    %v97 = vld [vmem:[#allocation6 + $0x58] sm:$0xff]
    %v98 = vld [vmem:[#allocation6 + $0x60] sm:$0xff]
    %v99 = vld [vmem:[#allocation6 + $0x68] sm:$0xff]
    %v100 = vld [vmem:[#allocation6 + $0x70] sm:$0xff]
    %v101 = vld [vmem:[#allocation6 + $0x78] sm:$0xff]
    %v102 = vld [vmem:[#allocation6 + $0x80] sm:$0xff]
    %v103 = vld [vmem:[#allocation6 + $0x88] sm:$0xff]
    %v104 = vld [vmem:[#allocation6 + $0x90] sm:$0xff]
    %v105 = vld [vmem:[#allocation6 + $0x98] sm:$0xff]
    %v106 = vld [vmem:[#allocation6 + $0xa0] sm:$0xff]
    %v107 = vld [vmem:[#allocation6 + $0xa8] sm:$0xff]
    %v108 = vld [vmem:[#allocation6 + $0xb0] sm:$0xff]
    %v109 = vld [vmem:[#allocation6 + $0xb8] sm:$0xff]
    %v110 = vld [vmem:[#allocation6 + $0xc0] sm:$0xff]
    %v111 = vld [vmem:[#allocation6 + $0xc8] sm:$0xff]
    %v112 = vld [vmem:[#allocation6 + $0xd0] sm:$0xff]
    %v113 = vld [vmem:[#allocation6 + $0xd8] sm:$0xff]
    %v114 = vld [vmem:[#allocation6 + $0xe0] sm:$0xff]
    %v115 = vld [vmem:[#allocation6 + $0xe8] sm:$0xff]
    %v116 = vld [vmem:[#allocation6 + $0xf0] sm:$0xff]
    %v117 = vld [vmem:[#allocation6 + $0xf8] sm:$0xff]
    %v118 = vld [vmem:[#allocation6 + $0x100] sm:$0xff]
    %v119 = vld [vmem:[#allocation6 + $0x108] sm:$0xff]
    %v120 = vld [vmem:[#allocation6 + $0x110] sm:$0xff]
    %v121 = vld [vmem:[#allocation6 + $0x118] sm:$0xff]
    %v122 = vld [vmem:[#allocation6 + $0x120] sm:$0xff]
    %v123 = vld [vmem:[#allocation6 + $0x128] sm:$0xff]
    %v124 = vld [vmem:[#allocation6 + $0x130] sm:$0xff]
    %v125 = vld [vmem:[#allocation6 + $0x138] sm:$0xff]
    %v126 = vld [vmem:[#allocation6 + $0x140] sm:$0xff]
    %v127 = vld [vmem:[#allocation6 + $0x148] sm:$0xff]
    %v128 = vld [vmem:[#allocation6 + $0x150] sm:$0xff]
    %v129 = vld [vmem:[#allocation6 + $0x158] sm:$0xff]
    %v130 = vld [vmem:[#allocation6 + $0x160] sm:$0xff]
    %v131 = vld [vmem:[#allocation6 + $0x168] sm:$0xff]
    %v132 = vld [vmem:[#allocation6 + $0x170] sm:$0xff]
    %v133 = vld [vmem:[#allocation6 + $0x178] sm:$0xff]
    %v134 = vld [vmem:[#allocation6 + $0x180] sm:$0xff]
    %v135 = vld [vmem:[#allocation6 + $0x188] sm:$0xff]
    %v136 = vld [vmem:[#allocation6 + $0x190] sm:$0xff]
    %v137 = vld [vmem:[#allocation6 + $0x198] sm:$0xff]
    %v138 = vld [vmem:[#allocation6 + $0x1a0] sm:$0xff]
    %v139 = vld [vmem:[#allocation6 + $0x1a8] sm:$0xff]
    %v140 = vld [vmem:[#allocation6 + $0x1b0] sm:$0xff]
    %v141 = vld [vmem:[#allocation6 + $0x1b8] sm:$0xff]
    %v142 = vld [vmem:[#allocation6 + $0x1c0] sm:$0xff]
    %v143 = vld [vmem:[#allocation6 + $0x1c8] sm:$0xff]
    %v144 = vld [vmem:[#allocation6 + $0x1d0] sm:$0xff]
    %v145 = vld [vmem:[#allocation6 + $0x1d8] sm:$0xff]
    %v146 = vld [vmem:[#allocation6 + $0x1e0] sm:$0xff]
    %v147 = vld [vmem:[#allocation6 + $0x1e8] sm:$0xff]
    %v148 = vld [vmem:[#allocation6 + $0x1f0] sm:$0xff]
    %v149 = vld [vmem:[#allocation6 + $0x1f8] sm:$0xff]
    %v150 = vld [vmem:[%s3] sm:$0xf]
    %v152 = vlaneseq
    %v153 = vshrl.u32 %v152, 7
    %v154 = vsub.s32 0, %v153
    %v155 = vrot.slane %v150, %v154
    %v156 = vlaneseq
    %v157 = vshrl.u32 %v156, 7
    %v158 = vsub.s32 1, %v157
    %v159 = vrot.slane %v150, %v158
    %v160 = vlaneseq
    %v161 = vshrl.u32 %v160, 7
    %v162 = vsub.s32 2, %v161
    %v163 = vrot.slane %v150, %v162
    %v164 = vlaneseq
    %v165 = vshrl.u32 %v164, 7
    %v166 = vsub.s32 3, %v165
    %v167 = vrot.slane %v150, %v166
    %172 = vmatprep.subr.mxu0 %v147
    %173 = vmatpush1.msra.mxu0 %v146
    %174 = vmatprep.subr.mxu0 %v143
    %175 = vmatpush1.msra.mxu0 %v142
    %176 = vmatprep.subr.mxu0 %v139
    %177 = vmatpush1.msra.mxu0 %v138
    %178 = vmatprep.subr.mxu0 %v135
    %179 = vmatpush1.msra.mxu0 %v134
    %180 = vmatprep.subr.mxu0 %v131
    %181 = vmatpush1.msra.mxu0 %v130
    %182 = vmatprep.subr.mxu0 %v127
    %183 = vmatpush1.msra.mxu0 %v126
    %184 = vmatprep.subr.mxu0 %v123
    %185 = vmatpush1.msra.mxu0 %v122
    %186 = vmatprep.subr.mxu0 %v119
    %187 = vmatpush1.msra.mxu0 %v118
    %188 = vmatprep.subr.mxu0 %v115
    %189 = vmatpush1.msra.mxu0 %v114
    %190 = vmatprep.subr.mxu0 %v111
    %191 = vmatpush1.msra.mxu0 %v110
    %192 = vmatprep.subr.mxu0 %v107
    %193 = vmatpush1.msra.mxu0 %v106
    %194 = vmatprep.subr.mxu0 %v103
    %195 = vmatpush1.msra.mxu0 %v102
    %196 = vmatprep.subr.mxu0 %v99
    %197 = vmatpush1.msra.mxu0 %v98
    %198 = vmatprep.subr.mxu0 %v95
    %199 = vmatpush1.msra.mxu0 %v94
    %200 = vmatprep.subr.mxu0 %v91
    %201 = vmatpush1.msra.mxu0 %v90
    %202 = vmatprep.subr.mxu0 %v87
    %203 = vmatpush1.msra.mxu0 %v86
    %204 = vmatprep.subr.mxu0 0.0
    %205 = vmatpush2.msra.mxu0 0.0
    %206 = vmatprep.subr.mxu0 0.0
    %207 = vmatpush2.msra.mxu0 0.0
    %208 = vmatprep.subr.mxu0 0.0
    %209 = vmatpush2.msra.mxu0 0.0
    %210 = vmatprep.subr.mxu0 0.0
    %211 = vmatpush2.msra.mxu0 0.0
    %212 = vmatprep.subr.mxu0 0.0
    %213 = vmatpush2.msra.mxu0 0.0
    %214 = vmatprep.subr.mxu0 0.0
    %215 = vmatpush2.msra.mxu0 0.0
    %216 = vmatprep.subr.mxu0 0.0
    %217 = vmatpush2.msra.mxu0 0.0
    %218 = vmatprep.subr.mxu0 0.0
    %219 = vmatpush2.msra.mxu0 0.0
    %220 = vmatprep.subr.mxu0 0.0
    %221 = vmatpush2.msra.mxu0 0.0
    %222 = vmatprep.subr.mxu0 0.0
    %223 = vmatpush2.msra.mxu0 0.0
    %224 = vmatprep.subr.mxu0 0.0
    %225 = vmatpush2.msra.mxu0 0.0
    %226 = vmatprep.subr.mxu0 0.0
    %227 = vmatpush2.msra.mxu0 0.0
    %228 = vmatprep.subr.mxu0 0.0
    %229 = vmatpush2.msra.mxu0 0.0
    %230 = vmatprep.subr.mxu0 0.0
    %231 = vmatpush2.msra.mxu0 0.0
    %232 = vmatprep.subr.mxu0 0.0
    %233 = vmatpush2.msra.mxu0 0.0
    %234 = vmatprep.subr.mxu0 0.0
    %235 = vmatpush2.msra.mxu0 0.0
    %236 = vmatprep.mubr.f32.mxu0 0.0
    %237 = vmatmul.mubr.f32.gmra.mxu0 %v70
    %v238 = vpop.f32.mrf.mxu0
    %v239 = vadd.f32 %v155, %v238
    %v240 = vpop.f32.mrf.mxu0
    %v241 = vadd.f32 %v159, %v240
    %242 = vmatprep.mubr.f32.mxu0 0.0
    %243 = vmatmul.mubr.f32.gmra.mxu0 %v71
    %v244 = vpop.f32.mrf.mxu0
    %v245 = vadd.f32 %v155, %v244
    %v246 = vpop.f32.mrf.mxu0
    %v247 = vadd.f32 %v159, %v246
    %248 = vmatprep.mubr.f32.mxu0 0.0
    %249 = vmatmul.mubr.f32.gmra.mxu0 %v72
    %v250 = vpop.f32.mrf.mxu0
    %v251 = vadd.f32 %v155, %v250
    %v252 = vpop.f32.mrf.mxu0
    %v253 = vadd.f32 %v159, %v252
    %254 = vmatprep.mubr.f32.mxu0 0.0
    %255 = vmatmul.mubr.f32.gmra.mxu0 %v73
    %v256 = vpop.f32.mrf.mxu0
    %v257 = vadd.f32 %v155, %v256
    %v258 = vpop.f32.mrf.mxu0
    %v259 = vadd.f32 %v159, %v258
    %260 = vmatprep.mubr.f32.mxu0 0.0
    %261 = vmatmul.mubr.f32.gmra.mxu0 %v74
    %v262 = vpop.f32.mrf.mxu0
    %v263 = vadd.f32 %v155, %v262
    %v264 = vpop.f32.mrf.mxu0
    %v265 = vadd.f32 %v159, %v264
    %266 = vmatprep.mubr.f32.mxu0 0.0
    %267 = vmatmul.mubr.f32.gmra.mxu0 %v75
    %v268 = vpop.f32.mrf.mxu0
    %v269 = vadd.f32 %v155, %v268
    %v270 = vpop.f32.mrf.mxu0
    %v271 = vadd.f32 %v159, %v270
    %272 = vmatprep.mubr.f32.mxu0 0.0
    %273 = vmatmul.mubr.f32.gmra.mxu0 %v76
    %v274 = vpop.f32.mrf.mxu0
    %v275 = vadd.f32 %v155, %v274
    %v276 = vpop.f32.mrf.mxu0
    %v277 = vadd.f32 %v159, %v276
    %278 = vmatprep.mubr.f32.mxu0 0.0
    %279 = vmatmul.mubr.f32.gmra.mxu0 %v77
    %v280 = vpop.f32.mrf.mxu0
    %v281 = vadd.f32 %v155, %v280
    %v282 = vpop.f32.mrf.mxu0
    %v283 = vadd.f32 %v159, %v282
    %284 = vdwg.mxu0
    %285 = vmatprep.subr.mxu0 %v149
    %286 = vmatpush1.msra.mxu0 %v148
    %287 = vmatprep.subr.mxu0 %v145
    %288 = vmatpush1.msra.mxu0 %v144
    %289 = vmatprep.subr.mxu0 %v141
    %290 = vmatpush1.msra.mxu0 %v140
    %291 = vmatprep.subr.mxu0 %v137
    %292 = vmatpush1.msra.mxu0 %v136
    %293 = vmatprep.subr.mxu0 %v133
    %294 = vmatpush1.msra.mxu0 %v132
    %295 = vmatprep.subr.mxu0 %v129
    %296 = vmatpush1.msra.mxu0 %v128
    %297 = vmatprep.subr.mxu0 %v125
    %298 = vmatpush1.msra.mxu0 %v124
    %299 = vmatprep.subr.mxu0 %v121
    %300 = vmatpush1.msra.mxu0 %v120
    %301 = vmatprep.subr.mxu0 %v117
    %302 = vmatpush1.msra.mxu0 %v116
    %303 = vmatprep.subr.mxu0 %v113
    %304 = vmatpush1.msra.mxu0 %v112
    %305 = vmatprep.subr.mxu0 %v109
    %306 = vmatpush1.msra.mxu0 %v108
    %307 = vmatprep.subr.mxu0 %v105
    %308 = vmatpush1.msra.mxu0 %v104
    %309 = vmatprep.subr.mxu0 %v101
    %310 = vmatpush1.msra.mxu0 %v100
    %311 = vmatprep.subr.mxu0 %v97
    %312 = vmatpush1.msra.mxu0 %v96
    %313 = vmatprep.subr.mxu0 %v93
    %314 = vmatpush1.msra.mxu0 %v92
    %315 = vmatprep.subr.mxu0 %v89
    %316 = vmatpush1.msra.mxu0 %v88
    %317 = vmatprep.subr.mxu0 0.0
    %318 = vmatpush2.msra.mxu0 0.0
    %319 = vmatprep.subr.mxu0 0.0
    %320 = vmatpush2.msra.mxu0 0.0
    %321 = vmatprep.subr.mxu0 0.0
    %322 = vmatpush2.msra.mxu0 0.0
    %323 = vmatprep.subr.mxu0 0.0
    %324 = vmatpush2.msra.mxu0 0.0
    %325 = vmatprep.subr.mxu0 0.0
    %326 = vmatpush2.msra.mxu0 0.0
    %327 = vmatprep.subr.mxu0 0.0
    %328 = vmatpush2.msra.mxu0 0.0
    %329 = vmatprep.subr.mxu0 0.0
    %330 = vmatpush2.msra.mxu0 0.0
    %331 = vmatprep.subr.mxu0 0.0
    %332 = vmatpush2.msra.mxu0 0.0
    %333 = vmatprep.subr.mxu0 0.0
    %334 = vmatpush2.msra.mxu0 0.0
    %335 = vmatprep.subr.mxu0 0.0
    %336 = vmatpush2.msra.mxu0 0.0
    %337 = vmatprep.subr.mxu0 0.0
    %338 = vmatpush2.msra.mxu0 0.0
    %339 = vmatprep.subr.mxu0 0.0
    %340 = vmatpush2.msra.mxu0 0.0
    %341 = vmatprep.subr.mxu0 0.0
    %342 = vmatpush2.msra.mxu0 0.0
    %343 = vmatprep.subr.mxu0 0.0
    %344 = vmatpush2.msra.mxu0 0.0
    %345 = vmatprep.subr.mxu0 0.0
    %346 = vmatpush2.msra.mxu0 0.0
    %347 = vmatprep.subr.mxu0 0.0
    %348 = vmatpush2.msra.mxu0 0.0
    %349 = vmatprep.mubr.f32.mxu0 0.0
    %350 = vmatmul.mubr.f32.gmra.mxu0 %v70
    %v351 = vpop.f32.mrf.mxu0
    %v352 = vadd.f32 %v163, %v351
    %v353 = vpop.f32.mrf.mxu0
    %v354 = vadd.f32 %v167, %v353
    %355 = vmatprep.mubr.f32.mxu0 0.0
    %356 = vmatmul.mubr.f32.gmra.mxu0 %v71
    %v357 = vpop.f32.mrf.mxu0
    %v358 = vadd.f32 %v163, %v357
    %v359 = vpop.f32.mrf.mxu0
    %v360 = vadd.f32 %v167, %v359
    %361 = vmatprep.mubr.f32.mxu0 0.0
    %362 = vmatmul.mubr.f32.gmra.mxu0 %v72
    %v363 = vpop.f32.mrf.mxu0
    %v364 = vadd.f32 %v163, %v363
    %v365 = vpop.f32.mrf.mxu0
    %v366 = vadd.f32 %v167, %v365
    %367 = vmatprep.mubr.f32.mxu0 0.0
    %368 = vmatmul.mubr.f32.gmra.mxu0 %v73
    %v369 = vpop.f32.mrf.mxu0
    %v370 = vadd.f32 %v163, %v369
    %v371 = vpop.f32.mrf.mxu0
    %v372 = vadd.f32 %v167, %v371
    %373 = vmatprep.mubr.f32.mxu0 0.0
    %374 = vmatmul.mubr.f32.gmra.mxu0 %v74
    %v375 = vpop.f32.mrf.mxu0
    %v376 = vadd.f32 %v163, %v375
    %v377 = vpop.f32.mrf.mxu0
    %v378 = vadd.f32 %v167, %v377
    %379 = vmatprep.mubr.f32.mxu0 0.0
    %380 = vmatmul.mubr.f32.gmra.mxu0 %v75
    %v381 = vpop.f32.mrf.mxu0
    %v382 = vadd.f32 %v163, %v381
    %v383 = vpop.f32.mrf.mxu0
    %v384 = vadd.f32 %v167, %v383
    %385 = vmatprep.mubr.f32.mxu0 0.0
    %386 = vmatmul.mubr.f32.gmra.mxu0 %v76
    %v387 = vpop.f32.mrf.mxu0
    %v388 = vadd.f32 %v163, %v387
    %v389 = vpop.f32.mrf.mxu0
    %v390 = vadd.f32 %v167, %v389
    %391 = vmatprep.mubr.f32.mxu0 0.0
    %392 = vmatmul.mubr.f32.gmra.mxu0 %v77
    %v393 = vpop.f32.mrf.mxu0
    %v394 = vadd.f32 %v163, %v393
    %v395 = vpop.f32.mrf.mxu0
    %v396 = vadd.f32 %v167, %v395
    %397 = vdwg.mxu0
    %398 = vst [vmem:[#allocation2] sm:$0xff] %v239
    %399 = vst [vmem:[#allocation2 + $0x8] sm:$0xff] %v241
    %400 = vst [vmem:[#allocation2 + $0x10] sm:$0xff] %v352
    %401 = vst [vmem:[#allocation2 + $0x18] sm:$0xff] %v354
    %402 = vst [vmem:[#allocation2 + $0x20] sm:$0xff] %v245
    %403 = vst [vmem:[#allocation2 + $0x28] sm:$0xff] %v247
    %404 = vst [vmem:[#allocation2 + $0x30] sm:$0xff] %v358
    %405 = vst [vmem:[#allocation2 + $0x38] sm:$0xff] %v360
    %406 = vst [vmem:[#allocation2 + $0x40] sm:$0xff] %v251
    %407 = vst [vmem:[#allocation2 + $0x48] sm:$0xff] %v253
    %408 = vst [vmem:[#allocation2 + $0x50] sm:$0xff] %v364
    %409 = vst [vmem:[#allocation2 + $0x58] sm:$0xff] %v366
    %410 = vst [vmem:[#allocation2 + $0x60] sm:$0xff] %v257
    %411 = vst [vmem:[#allocation2 + $0x68] sm:$0xff] %v259
    %412 = vst [vmem:[#allocation2 + $0x70] sm:$0xff] %v370
    %413 = vst [vmem:[#allocation2 + $0x78] sm:$0xff] %v372
    %414 = vst [vmem:[#allocation2 + $0x80] sm:$0xff] %v263
    %415 = vst [vmem:[#allocation2 + $0x88] sm:$0xff] %v265
    %416 = vst [vmem:[#allocation2 + $0x90] sm:$0xff] %v376
    %417 = vst [vmem:[#allocation2 + $0x98] sm:$0xff] %v378
    %418 = vst [vmem:[#allocation2 + $0xa0] sm:$0xff] %v269
    %419 = vst [vmem:[#allocation2 + $0xa8] sm:$0xff] %v271
    %420 = vst [vmem:[#allocation2 + $0xb0] sm:$0xff] %v382
    %421 = vst [vmem:[#allocation2 + $0xb8] sm:$0xff] %v384
    %422 = vst [vmem:[#allocation2 + $0xc0] sm:$0xff] %v275
    %423 = vst [vmem:[#allocation2 + $0xc8] sm:$0xff] %v277
    %424 = vst [vmem:[#allocation2 + $0xd0] sm:$0xff] %v388
    %425 = vst [vmem:[#allocation2 + $0xd8] sm:$0xff] %v390
    %426 = vst [vmem:[#allocation2 + $0xe0] sm:$0xff] %v281
    %427 = vst [vmem:[#allocation2 + $0xe8] sm:$0xff] %v283
    %428 = vst [vmem:[#allocation2 + $0xf0] sm:$0xff] %v394
    %429 = vst [vmem:[#allocation2 + $0xf8] sm:$0xff] %v396
    %s430 = scalar_lea.vmem [#allocation2], 224
    %v431 = vld [vmem:[%s430] sm:$0xff]
    %v432 = vld [vmem:[%s430 + $0x8] sm:$0xff]
    %v433 = vld [vmem:[%s430 + $0x10] sm:$0xff]
    %v434 = vld [vmem:[%s430 + $0x18] sm:$0xff]
    %v435 = vld [vmem:[#allocation8] sm:$0xff]
    %v436 = vld [vmem:[#allocation8 + $0x8] sm:$0xff]
    %v437 = vld [vmem:[#allocation8 + $0x10] sm:$0xff]
    %v438 = vld [vmem:[#allocation8 + $0x18] sm:$0xff]
    %v439 = vld [vmem:[#allocation8 + $0x20] sm:$0xff]
    %v440 = vld [vmem:[#allocation8 + $0x28] sm:$0xff]
    %v441 = vld [vmem:[#allocation8 + $0x30] sm:$0xff]
    %v442 = vld [vmem:[#allocation8 + $0x38] sm:$0xff]
    %v443 = vld [vmem:[#allocation8 + $0x40] sm:$0xff]
    %v444 = vld [vmem:[#allocation8 + $0x48] sm:$0xff]
    %v445 = vld [vmem:[#allocation8 + $0x50] sm:$0xff]
    %v446 = vld [vmem:[#allocation8 + $0x58] sm:$0xff]
    %v447 = vld [vmem:[#allocation8 + $0x60] sm:$0xff]
    %v448 = vld [vmem:[#allocation8 + $0x68] sm:$0xff]
    %v449 = vld [vmem:[#allocation8 + $0x70] sm:$0xff]
    %v450 = vld [vmem:[#allocation8 + $0x78] sm:$0xff]
    %v451 = vld [vmem:[#allocation8 + $0x80] sm:$0xff]
    %v452 = vld [vmem:[#allocation8 + $0x88] sm:$0xff]
    %v453 = vld [vmem:[#allocation8 + $0x90] sm:$0xff]
    %v454 = vld [vmem:[#allocation8 + $0x98] sm:$0xff]
    %v455 = vld [vmem:[#allocation8 + $0xa0] sm:$0xff]
    %v456 = vld [vmem:[#allocation8 + $0xa8] sm:$0xff]
    %v457 = vld [vmem:[#allocation8 + $0xb0] sm:$0xff]
    %v458 = vld [vmem:[#allocation8 + $0xb8] sm:$0xff]
    %v459 = vld [vmem:[#allocation8 + $0xc0] sm:$0xff]
    %v460 = vld [vmem:[#allocation8 + $0xc8] sm:$0xff]
    %v461 = vld [vmem:[#allocation8 + $0xd0] sm:$0xff]
    %v462 = vld [vmem:[#allocation8 + $0xd8] sm:$0xff]
    %v463 = vld [vmem:[#allocation8 + $0xe0] sm:$0xff]
    %v464 = vld [vmem:[#allocation8 + $0xe8] sm:$0xff]
    %v465 = vld [vmem:[#allocation8 + $0xf0] sm:$0xff]
    %v466 = vld [vmem:[#allocation8 + $0xf8] sm:$0xff]
    %v467 = vld [vmem:[#allocation8 + $0x100] sm:$0xff]
    %v468 = vld [vmem:[#allocation8 + $0x108] sm:$0xff]
    %v469 = vld [vmem:[#allocation8 + $0x110] sm:$0xff]
    %v470 = vld [vmem:[#allocation8 + $0x118] sm:$0xff]
    %v471 = vld [vmem:[#allocation8 + $0x120] sm:$0xff]
    %v472 = vld [vmem:[#allocation8 + $0x128] sm:$0xff]
    %v473 = vld [vmem:[#allocation8 + $0x130] sm:$0xff]
    %v474 = vld [vmem:[#allocation8 + $0x138] sm:$0xff]
    %v475 = vld [vmem:[#allocation8 + $0x140] sm:$0xff]
    %v476 = vld [vmem:[#allocation8 + $0x148] sm:$0xff]
    %v477 = vld [vmem:[#allocation8 + $0x150] sm:$0xff]
    %v478 = vld [vmem:[#allocation8 + $0x158] sm:$0xff]
    %v479 = vld [vmem:[#allocation8 + $0x160] sm:$0xff]
    %v480 = vld [vmem:[#allocation8 + $0x168] sm:$0xff]
    %v481 = vld [vmem:[#allocation8 + $0x170] sm:$0xff]
    %v482 = vld [vmem:[#allocation8 + $0x178] sm:$0xff]
    %v483 = vld [vmem:[#allocation8 + $0x180] sm:$0xff]
    %v484 = vld [vmem:[#allocation8 + $0x188] sm:$0xff]
    %v485 = vld [vmem:[#allocation8 + $0x190] sm:$0xff]
    %v486 = vld [vmem:[#allocation8 + $0x198] sm:$0xff]
    %v487 = vld [vmem:[#allocation8 + $0x1a0] sm:$0xff]
    %v488 = vld [vmem:[#allocation8 + $0x1a8] sm:$0xff]
    %v489 = vld [vmem:[#allocation8 + $0x1b0] sm:$0xff]
    %v490 = vld [vmem:[#allocation8 + $0x1b8] sm:$0xff]
    %v491 = vld [vmem:[#allocation8 + $0x1c0] sm:$0xff]
    %v492 = vld [vmem:[#allocation8 + $0x1c8] sm:$0xff]
    %v493 = vld [vmem:[#allocation8 + $0x1d0] sm:$0xff]
    %v494 = vld [vmem:[#allocation8 + $0x1d8] sm:$0xff]
    %v495 = vld [vmem:[#allocation8 + $0x1e0] sm:$0xff]
    %v496 = vld [vmem:[#allocation8 + $0x1e8] sm:$0xff]
    %v497 = vld [vmem:[#allocation8 + $0x1f0] sm:$0xff]
    %v498 = vld [vmem:[#allocation8 + $0x1f8] sm:$0xff]
    %499 = vmatprep.subr.mxu0 %v496
    %500 = vmatpush1.msra.mxu0 %v495
    %501 = vmatprep.subr.mxu0 %v492
    %502 = vmatpush1.msra.mxu0 %v491
    %503 = vmatprep.subr.mxu0 %v488
    %504 = vmatpush1.msra.mxu0 %v487
    %505 = vmatprep.subr.mxu0 %v484
    %506 = vmatpush1.msra.mxu0 %v483
    %507 = vmatprep.subr.mxu0 %v480
    %508 = vmatpush1.msra.mxu0 %v479
    %509 = vmatprep.subr.mxu0 %v476
    %510 = vmatpush1.msra.mxu0 %v475
    %511 = vmatprep.subr.mxu0 %v472
    %512 = vmatpush1.msra.mxu0 %v471
    %513 = vmatprep.subr.mxu0 %v468
    %514 = vmatpush1.msra.mxu0 %v467
    %515 = vmatprep.subr.mxu0 %v464
    %516 = vmatpush1.msra.mxu0 %v463
    %517 = vmatprep.subr.mxu0 %v460
    %518 = vmatpush1.msra.mxu0 %v459
    %519 = vmatprep.subr.mxu0 %v456
    %520 = vmatpush1.msra.mxu0 %v455
    %521 = vmatprep.subr.mxu0 %v452
    %522 = vmatpush1.msra.mxu0 %v451
    %523 = vmatprep.subr.mxu0 %v448
    %524 = vmatpush1.msra.mxu0 %v447
    %525 = vmatprep.subr.mxu0 %v444
    %526 = vmatpush1.msra.mxu0 %v443
    %527 = vmatprep.subr.mxu0 %v440
    %528 = vmatpush1.msra.mxu0 %v439
    %529 = vmatprep.subr.mxu0 %v436
    %530 = vmatpush1.msra.mxu0 %v435
    %531 = vmatprep.subr.mxu0 0.0
    %532 = vmatpush2.msra.mxu0 0.0
    %533 = vmatprep.subr.mxu0 0.0
    %534 = vmatpush2.msra.mxu0 0.0
    %535 = vmatprep.subr.mxu0 0.0
    %536 = vmatpush2.msra.mxu0 0.0
    %537 = vmatprep.subr.mxu0 0.0
    %538 = vmatpush2.msra.mxu0 0.0
    %539 = vmatprep.subr.mxu0 0.0
    %540 = vmatpush2.msra.mxu0 0.0
    %541 = vmatprep.subr.mxu0 0.0
    %542 = vmatpush2.msra.mxu0 0.0
    %543 = vmatprep.subr.mxu0 0.0
    %544 = vmatpush2.msra.mxu0 0.0
    %545 = vmatprep.subr.mxu0 0.0
    %546 = vmatpush2.msra.mxu0 0.0
    %547 = vmatprep.subr.mxu0 0.0
    %548 = vmatpush2.msra.mxu0 0.0
    %549 = vmatprep.subr.mxu0 0.0
    %550 = vmatpush2.msra.mxu0 0.0
    %551 = vmatprep.subr.mxu0 0.0
    %552 = vmatpush2.msra.mxu0 0.0
    %553 = vmatprep.subr.mxu0 0.0
    %554 = vmatpush2.msra.mxu0 0.0
    %555 = vmatprep.subr.mxu0 0.0
    %556 = vmatpush2.msra.mxu0 0.0
    %557 = vmatprep.subr.mxu0 0.0
    %558 = vmatpush2.msra.mxu0 0.0
    %559 = vmatprep.subr.mxu0 0.0
    %560 = vmatpush2.msra.mxu0 0.0
    %561 = vmatprep.subr.mxu0 0.0
    %562 = vmatpush2.msra.mxu0 0.0
    %563 = vmatprep.mubr.f32.mxu0 0.0
    %564 = vmatmul.mubr.f32.gmra.mxu0 0.0
    %v565 = vpop.f32.mrf.mxu0
    %v566 = vadd.f32 0.0, %v565
    %v567 = vpop.f32.mrf.mxu0
    %v568 = vadd.f32 0.0, %v567
    %569 = vdwg.mxu0
    %570 = vmatprep.subr.mxu0 %v498
    %571 = vmatpush1.msra.mxu0 %v497
    %572 = vmatprep.subr.mxu0 %v494
    %573 = vmatpush1.msra.mxu0 %v493
    %574 = vmatprep.subr.mxu0 %v490
    %575 = vmatpush1.msra.mxu0 %v489
    %576 = vmatprep.subr.mxu0 %v486
    %577 = vmatpush1.msra.mxu0 %v485
    %578 = vmatprep.subr.mxu0 %v482
    %579 = vmatpush1.msra.mxu0 %v481
    %580 = vmatprep.subr.mxu0 %v478
    %581 = vmatpush1.msra.mxu0 %v477
    %582 = vmatprep.subr.mxu0 %v474
    %583 = vmatpush1.msra.mxu0 %v473
    %584 = vmatprep.subr.mxu0 %v470
    %585 = vmatpush1.msra.mxu0 %v469
    %586 = vmatprep.subr.mxu0 %v466
    %587 = vmatpush1.msra.mxu0 %v465
    %588 = vmatprep.subr.mxu0 %v462
    %589 = vmatpush1.msra.mxu0 %v461
    %590 = vmatprep.subr.mxu0 %v458
    %591 = vmatpush1.msra.mxu0 %v457
    %592 = vmatprep.subr.mxu0 %v454
    %593 = vmatpush1.msra.mxu0 %v453
    %594 = vmatprep.subr.mxu0 %v450
    %595 = vmatpush1.msra.mxu0 %v449
    %596 = vmatprep.subr.mxu0 %v446
    %597 = vmatpush1.msra.mxu0 %v445
    %598 = vmatprep.subr.mxu0 %v442
    %599 = vmatpush1.msra.mxu0 %v441
    %600 = vmatprep.subr.mxu0 %v438
    %601 = vmatpush1.msra.mxu0 %v437
    %602 = vmatprep.subr.mxu0 0.0
    %603 = vmatpush2.msra.mxu0 0.0
    %604 = vmatprep.subr.mxu0 0.0
    %605 = vmatpush2.msra.mxu0 0.0
    %606 = vmatprep.subr.mxu0 0.0
    %607 = vmatpush2.msra.mxu0 0.0
    %608 = vmatprep.subr.mxu0 0.0
    %609 = vmatpush2.msra.mxu0 0.0
    %610 = vmatprep.subr.mxu0 0.0
    %611 = vmatpush2.msra.mxu0 0.0
    %612 = vmatprep.subr.mxu0 0.0
    %613 = vmatpush2.msra.mxu0 0.0
    %614 = vmatprep.subr.mxu0 0.0
    %615 = vmatpush2.msra.mxu0 0.0
    %616 = vmatprep.subr.mxu0 0.0
    %617 = vmatpush2.msra.mxu0 0.0
    %618 = vmatprep.subr.mxu0 0.0
    %619 = vmatpush2.msra.mxu0 0.0
    %620 = vmatprep.subr.mxu0 0.0
    %621 = vmatpush2.msra.mxu0 0.0
    %622 = vmatprep.subr.mxu0 0.0
    %623 = vmatpush2.msra.mxu0 0.0
    %624 = vmatprep.subr.mxu0 0.0
    %625 = vmatpush2.msra.mxu0 0.0
    %626 = vmatprep.subr.mxu0 0.0
    %627 = vmatpush2.msra.mxu0 0.0
    %628 = vmatprep.subr.mxu0 0.0
    %629 = vmatpush2.msra.mxu0 0.0
    %630 = vmatprep.subr.mxu0 0.0
    %631 = vmatpush2.msra.mxu0 0.0
    %632 = vmatprep.subr.mxu0 0.0
    %633 = vmatpush2.msra.mxu0 0.0
    %634 = vmatprep.mubr.f32.mxu0 0.0
    %635 = vmatmul.mubr.f32.gmra.mxu0 0.0
    %v636 = vpop.f32.mrf.mxu0
    %v637 = vadd.f32 0.0, %v636
    %v638 = vpop.f32.mrf.mxu0
    %v639 = vadd.f32 0.0, %v638
    %640 = vdwg.mxu0
    %v641 = vadd.f32 %v431, %v566
    %v642 = vadd.f32 %v432, %v568
    %v643 = vadd.f32 %v433, %v637
    %v644 = vadd.f32 %v434, %v639
    %v645 = vxor.u32 %v641, 2147483648
    %v646 = vmul.f32 %v645, 1.442695
    %v647 = vpow.pop %v646
    %v648 = vadd.f32 %v647, 1.0
    %v649 = vrcp.pop %v648
    %v650 = vmul.f32 1.0, %v649
    %v651 = vxor.u32 %v642, 2147483648
    %v652 = vmul.f32 %v651, 1.442695
    %v653 = vpow.pop %v652
    %v654 = vadd.f32 %v653, 1.0
    %v655 = vrcp.pop %v654
    %v656 = vmul.f32 1.0, %v655
    %v657 = vtanh.pop %v643
    %v658 = vxor.u32 %v644, 2147483648
    %v659 = vmul.f32 %v658, 1.442695
    %v660 = vpow.pop %v659
    %v661 = vadd.f32 %v660, 1.0
    %v662 = vrcp.pop %v661
    %v663 = vmul.f32 1.0, %v662
    %v664 = vmul.f32 %v656, 0.0
    %v665 = vmul.f32 %v650, %v657
    %v666 = vadd.f32 %v664, %v665
    %v667 = vtanh.pop %v666
    %v668 = vmul.f32 %v663, %v667
    %s669 = scalar_lea.vmem [#allocation2], 192
    %v670 = vld [vmem:[%s669] sm:$0xff]
    %v671 = vld [vmem:[%s669 + $0x8] sm:$0xff]
    %v672 = vld [vmem:[%s669 + $0x10] sm:$0xff]
    %v673 = vld [vmem:[%s669 + $0x18] sm:$0xff]
    %674 = vmatprep.subr.mxu0 %v496
    %675 = vmatpush1.msra.mxu0 %v495
    %676 = vmatprep.subr.mxu0 %v492
    %677 = vmatpush1.msra.mxu0 %v491
    %678 = vmatprep.subr.mxu0 %v488
    %679 = vmatpush1.msra.mxu0 %v487
    %680 = vmatprep.subr.mxu0 %v484
    %681 = vmatpush1.msra.mxu0 %v483
    %682 = vmatprep.subr.mxu0 %v480
    %683 = vmatpush1.msra.mxu0 %v479
    %684 = vmatprep.subr.mxu0 %v476
    %685 = vmatpush1.msra.mxu0 %v475
    %686 = vmatprep.subr.mxu0 %v472
    %687 = vmatpush1.msra.mxu0 %v471
    %688 = vmatprep.subr.mxu0 %v468
    %689 = vmatpush1.msra.mxu0 %v467
    %690 = vmatprep.subr.mxu0 %v464
    %691 = vmatpush1.msra.mxu0 %v463
    %692 = vmatprep.subr.mxu0 %v460
    %693 = vmatpush1.msra.mxu0 %v459
    %694 = vmatprep.subr.mxu0 %v456
    %695 = vmatpush1.msra.mxu0 %v455
    %696 = vmatprep.subr.mxu0 %v452
    %697 = vmatpush1.msra.mxu0 %v451
    %698 = vmatprep.subr.mxu0 %v448
    %699 = vmatpush1.msra.mxu0 %v447
    %700 = vmatprep.subr.mxu0 %v444
    %701 = vmatpush1.msra.mxu0 %v443
    %702 = vmatprep.subr.mxu0 %v440
    %703 = vmatpush1.msra.mxu0 %v439
    %704 = vmatprep.subr.mxu0 %v436
    %705 = vmatpush1.msra.mxu0 %v435
    %706 = vmatprep.subr.mxu0 0.0
    %707 = vmatpush2.msra.mxu0 0.0
    %708 = vmatprep.subr.mxu0 0.0
    %709 = vmatpush2.msra.mxu0 0.0
    %710 = vmatprep.subr.mxu0 0.0
    %711 = vmatpush2.msra.mxu0 0.0
    %712 = vmatprep.subr.mxu0 0.0
    %713 = vmatpush2.msra.mxu0 0.0
    %714 = vmatprep.subr.mxu0 0.0
    %715 = vmatpush2.msra.mxu0 0.0
    %716 = vmatprep.subr.mxu0 0.0
    %717 = vmatpush2.msra.mxu0 0.0
    %718 = vmatprep.subr.mxu0 0.0
    %719 = vmatpush2.msra.mxu0 0.0
    %720 = vmatprep.subr.mxu0 0.0
    %721 = vmatpush2.msra.mxu0 0.0
    %722 = vmatprep.subr.mxu0 0.0
    %723 = vmatpush2.msra.mxu0 0.0
    %724 = vmatprep.subr.mxu0 0.0
    %725 = vmatpush2.msra.mxu0 0.0
    %726 = vmatprep.subr.mxu0 0.0
    %727 = vmatpush2.msra.mxu0 0.0
    %728 = vmatprep.subr.mxu0 0.0
    %729 = vmatpush2.msra.mxu0 0.0
    %730 = vmatprep.subr.mxu0 0.0
    %731 = vmatpush2.msra.mxu0 0.0
    %732 = vmatprep.subr.mxu0 0.0
    %733 = vmatpush2.msra.mxu0 0.0
    %734 = vmatprep.subr.mxu0 0.0
    %735 = vmatpush2.msra.mxu0 0.0
    %736 = vmatprep.subr.mxu0 0.0
    %737 = vmatpush2.msra.mxu0 0.0
    %738 = vmatprep.mubr.f32.mxu0 0.0
    %739 = vmatmul.mubr.f32.gmra.mxu0 %v668
    %v740 = vpop.f32.mrf.mxu0
    %v741 = vadd.f32 0.0, %v740
    %v742 = vpop.f32.mrf.mxu0
    %v743 = vadd.f32 0.0, %v742
    %744 = vdwg.mxu0
    %745 = vmatprep.subr.mxu0 %v498
    %746 = vmatpush1.msra.mxu0 %v497
    %747 = vmatprep.subr.mxu0 %v494
    %748 = vmatpush1.msra.mxu0 %v493
    %749 = vmatprep.subr.mxu0 %v490
    %750 = vmatpush1.msra.mxu0 %v489
    %751 = vmatprep.subr.mxu0 %v486
    %752 = vmatpush1.msra.mxu0 %v485
    %753 = vmatprep.subr.mxu0 %v482
    %754 = vmatpush1.msra.mxu0 %v481
    %755 = vmatprep.subr.mxu0 %v478
    %756 = vmatpush1.msra.mxu0 %v477
    %757 = vmatprep.subr.mxu0 %v474
    %758 = vmatpush1.msra.mxu0 %v473
    %759 = vmatprep.subr.mxu0 %v470
    %760 = vmatpush1.msra.mxu0 %v469
    %761 = vmatprep.subr.mxu0 %v466
    %762 = vmatpush1.msra.mxu0 %v465
    %763 = vmatprep.subr.mxu0 %v462
    %764 = vmatpush1.msra.mxu0 %v461
    %765 = vmatprep.subr.mxu0 %v458
    %766 = vmatpush1.msra.mxu0 %v457
    %767 = vmatprep.subr.mxu0 %v454
    %768 = vmatpush1.msra.mxu0 %v453
    %769 = vmatprep.subr.mxu0 %v450
    %770 = vmatpush1.msra.mxu0 %v449
    %771 = vmatprep.subr.mxu0 %v446
    %772 = vmatpush1.msra.mxu0 %v445
    %773 = vmatprep.subr.mxu0 %v442
    %774 = vmatpush1.msra.mxu0 %v441
    %775 = vmatprep.subr.mxu0 %v438
    %776 = vmatpush1.msra.mxu0 %v437
    %777 = vmatprep.subr.mxu0 0.0
    %778 = vmatpush2.msra.mxu0 0.0
    %779 = vmatprep.subr.mxu0 0.0
    %780 = vmatpush2.msra.mxu0 0.0
    %781 = vmatprep.subr.mxu0 0.0
    %782 = vmatpush2.msra.mxu0 0.0
    %783 = vmatprep.subr.mxu0 0.0
    %784 = vmatpush2.msra.mxu0 0.0
    %785 = vmatprep.subr.mxu0 0.0
    %786 = vmatpush2.msra.mxu0 0.0
    %787 = vmatprep.subr.mxu0 0.0
    %788 = vmatpush2.msra.mxu0 0.0
    %789 = vmatprep.subr.mxu0 0.0
    %790 = vmatpush2.msra.mxu0 0.0
    %791 = vmatprep.subr.mxu0 0.0
    %792 = vmatpush2.msra.mxu0 0.0
    %793 = vmatprep.subr.mxu0 0.0
    %794 = vmatpush2.msra.mxu0 0.0
    %795 = vmatprep.subr.mxu0 0.0
    %796 = vmatpush2.msra.mxu0 0.0
    %797 = vmatprep.subr.mxu0 0.0
    %798 = vmatpush2.msra.mxu0 0.0
    %799 = vmatprep.subr.mxu0 0.0
    %800 = vmatpush2.msra.mxu0 0.0
    %801 = vmatprep.subr.mxu0 0.0
    %802 = vmatpush2.msra.mxu0 0.0
    %803 = vmatprep.subr.mxu0 0.0
    %804 = vmatpush2.msra.mxu0 0.0
    %805 = vmatprep.subr.mxu0 0.0
    %806 = vmatpush2.msra.mxu0 0.0
    %807 = vmatprep.subr.mxu0 0.0
    %808 = vmatpush2.msra.mxu0 0.0
    %809 = vmatprep.mubr.f32.mxu0 0.0
    %810 = vmatmul.mubr.f32.gmra.mxu0 %v668
    %v811 = vpop.f32.mrf.mxu0
    %v812 = vadd.f32 0.0, %v811
    %v813 = vpop.f32.mrf.mxu0
    %v814 = vadd.f32 0.0, %v813
    %815 = vdwg.mxu0
    %v816 = vadd.f32 %v670, %v741
    %v817 = vadd.f32 %v671, %v743
    %v818 = vadd.f32 %v672, %v812
    %v819 = vadd.f32 %v673, %v814
    %v820 = vxor.u32 %v816, 2147483648
    %v821 = vmul.f32 %v820, 1.442695
    %v822 = vpow.pop %v821
    %v823 = vadd.f32 %v822, 1.0
    %v824 = vrcp.pop %v823
    %v825 = vmul.f32 1.0, %v824
    %v826 = vxor.u32 %v817, 2147483648
    %v827 = vmul.f32 %v826, 1.442695
    %v828 = vpow.pop %v827
    %v829 = vadd.f32 %v828, 1.0
    %v830 = vrcp.pop %v829
    %v831 = vmul.f32 1.0, %v830
    %v832 = vtanh.pop %v818
    %v833 = vxor.u32 %v819, 2147483648
    %v834 = vmul.f32 %v833, 1.442695
    %v835 = vpow.pop %v834
    %v836 = vadd.f32 %v835, 1.0
    %v837 = vrcp.pop %v836
    %v838 = vmul.f32 1.0, %v837
    %v839 = vmul.f32 %v831, %v666
    %v840 = vmul.f32 %v825, %v832
    %v841 = vadd.f32 %v839, %v840
    %v842 = vtanh.pop %v841
    %v843 = vmul.f32 %v838, %v842
    %s844 = scalar_lea.vmem [#allocation2], 160
    %v845 = vld [vmem:[%s844] sm:$0xff]
    %v846 = vld [vmem:[%s844 + $0x8] sm:$0xff]
    %v847 = vld [vmem:[%s844 + $0x10] sm:$0xff]
    %v848 = vld [vmem:[%s844 + $0x18] sm:$0xff]
    %849 = vmatprep.subr.mxu0 %v496
    %850 = vmatpush1.msra.mxu0 %v495
    %851 = vmatprep.subr.mxu0 %v492
    %852 = vmatpush1.msra.mxu0 %v491
    %853 = vmatprep.subr.mxu0 %v488
    %854 = vmatpush1.msra.mxu0 %v487
    %855 = vmatprep.subr.mxu0 %v484
    %856 = vmatpush1.msra.mxu0 %v483
    %857 = vmatprep.subr.mxu0 %v480
    %858 = vmatpush1.msra.mxu0 %v479
    %859 = vmatprep.subr.mxu0 %v476
    %860 = vmatpush1.msra.mxu0 %v475
    %861 = vmatprep.subr.mxu0 %v472
    %862 = vmatpush1.msra.mxu0 %v471
    %863 = vmatprep.subr.mxu0 %v468
    %864 = vmatpush1.msra.mxu0 %v467
    %865 = vmatprep.subr.mxu0 %v464
    %866 = vmatpush1.msra.mxu0 %v463
    %867 = vmatprep.subr.mxu0 %v460
    %868 = vmatpush1.msra.mxu0 %v459
    %869 = vmatprep.subr.mxu0 %v456
    %870 = vmatpush1.msra.mxu0 %v455
    %871 = vmatprep.subr.mxu0 %v452
    %872 = vmatpush1.msra.mxu0 %v451
    %873 = vmatprep.subr.mxu0 %v448
    %874 = vmatpush1.msra.mxu0 %v447
    %875 = vmatprep.subr.mxu0 %v444
    %876 = vmatpush1.msra.mxu0 %v443
    %877 = vmatprep.subr.mxu0 %v440
    %878 = vmatpush1.msra.mxu0 %v439
    %879 = vmatprep.subr.mxu0 %v436
    %880 = vmatpush1.msra.mxu0 %v435
    %881 = vmatprep.subr.mxu0 0.0
    %882 = vmatpush2.msra.mxu0 0.0
    %883 = vmatprep.subr.mxu0 0.0
    %884 = vmatpush2.msra.mxu0 0.0
    %885 = vmatprep.subr.mxu0 0.0
    %886 = vmatpush2.msra.mxu0 0.0
    %887 = vmatprep.subr.mxu0 0.0
    %888 = vmatpush2.msra.mxu0 0.0
    %889 = vmatprep.subr.mxu0 0.0
    %890 = vmatpush2.msra.mxu0 0.0
    %891 = vmatprep.subr.mxu0 0.0
    %892 = vmatpush2.msra.mxu0 0.0
    %893 = vmatprep.subr.mxu0 0.0
    %894 = vmatpush2.msra.mxu0 0.0
    %895 = vmatprep.subr.mxu0 0.0
    %896 = vmatpush2.msra.mxu0 0.0
    %897 = vmatprep.subr.mxu0 0.0
    %898 = vmatpush2.msra.mxu0 0.0
    %899 = vmatprep.subr.mxu0 0.0
    %900 = vmatpush2.msra.mxu0 0.0
    %901 = vmatprep.subr.mxu0 0.0
    %902 = vmatpush2.msra.mxu0 0.0
    %903 = vmatprep.subr.mxu0 0.0
    %904 = vmatpush2.msra.mxu0 0.0
    %905 = vmatprep.subr.mxu0 0.0
    %906 = vmatpush2.msra.mxu0 0.0
    %907 = vmatprep.subr.mxu0 0.0
    %908 = vmatpush2.msra.mxu0 0.0
    %909 = vmatprep.subr.mxu0 0.0
    %910 = vmatpush2.msra.mxu0 0.0
    %911 = vmatprep.subr.mxu0 0.0
    %912 = vmatpush2.msra.mxu0 0.0
    %913 = vmatprep.mubr.f32.mxu0 0.0
    %914 = vmatmul.mubr.f32.gmra.mxu0 %v843
    %v915 = vpop.f32.mrf.mxu0
    %v916 = vadd.f32 0.0, %v915
    %v917 = vpop.f32.mrf.mxu0
    %v918 = vadd.f32 0.0, %v917
    %919 = vdwg.mxu0
    %920 = vmatprep.subr.mxu0 %v498
    %921 = vmatpush1.msra.mxu0 %v497
    %922 = vmatprep.subr.mxu0 %v494
    %923 = vmatpush1.msra.mxu0 %v493
    %924 = vmatprep.subr.mxu0 %v490
    %925 = vmatpush1.msra.mxu0 %v489
    %926 = vmatprep.subr.mxu0 %v486
    %927 = vmatpush1.msra.mxu0 %v485
    %928 = vmatprep.subr.mxu0 %v482
    %929 = vmatpush1.msra.mxu0 %v481
    %930 = vmatprep.subr.mxu0 %v478
    %931 = vmatpush1.msra.mxu0 %v477
    %932 = vmatprep.subr.mxu0 %v474
    %933 = vmatpush1.msra.mxu0 %v473
    %934 = vmatprep.subr.mxu0 %v470
    %935 = vmatpush1.msra.mxu0 %v469
    %936 = vmatprep.subr.mxu0 %v466
    %937 = vmatpush1.msra.mxu0 %v465
    %938 = vmatprep.subr.mxu0 %v462
    %939 = vmatpush1.msra.mxu0 %v461
    %940 = vmatprep.subr.mxu0 %v458
    %941 = vmatpush1.msra.mxu0 %v457
    %942 = vmatprep.subr.mxu0 %v454
    %943 = vmatpush1.msra.mxu0 %v453
    %944 = vmatprep.subr.mxu0 %v450
    %945 = vmatpush1.msra.mxu0 %v449
    %946 = vmatprep.subr.mxu0 %v446
    %947 = vmatpush1.msra.mxu0 %v445
    %948 = vmatprep.subr.mxu0 %v442
    %949 = vmatpush1.msra.mxu0 %v441
    %950 = vmatprep.subr.mxu0 %v438
    %951 = vmatpush1.msra.mxu0 %v437
    %952 = vmatprep.subr.mxu0 0.0
    %953 = vmatpush2.msra.mxu0 0.0
    %954 = vmatprep.subr.mxu0 0.0
    %955 = vmatpush2.msra.mxu0 0.0
    %956 = vmatprep.subr.mxu0 0.0
    %957 = vmatpush2.msra.mxu0 0.0
    %958 = vmatprep.subr.mxu0 0.0
    %959 = vmatpush2.msra.mxu0 0.0
    %960 = vmatprep.subr.mxu0 0.0
    %961 = vmatpush2.msra.mxu0 0.0
    %962 = vmatprep.subr.mxu0 0.0
    %963 = vmatpush2.msra.mxu0 0.0
    %964 = vmatprep.subr.mxu0 0.0
    %965 = vmatpush2.msra.mxu0 0.0
    %966 = vmatprep.subr.mxu0 0.0
    %967 = vmatpush2.msra.mxu0 0.0
    %968 = vmatprep.subr.mxu0 0.0
    %969 = vmatpush2.msra.mxu0 0.0
    %970 = vmatprep.subr.mxu0 0.0
    %971 = vmatpush2.msra.mxu0 0.0
    %972 = vmatprep.subr.mxu0 0.0
    %973 = vmatpush2.msra.mxu0 0.0
    %974 = vmatprep.subr.mxu0 0.0
    %975 = vmatpush2.msra.mxu0 0.0
    %976 = vmatprep.subr.mxu0 0.0
    %977 = vmatpush2.msra.mxu0 0.0
    %978 = vmatprep.subr.mxu0 0.0
    %979 = vmatpush2.msra.mxu0 0.0
    %980 = vmatprep.subr.mxu0 0.0
    %981 = vmatpush2.msra.mxu0 0.0
    %982 = vmatprep.subr.mxu0 0.0
    %983 = vmatpush2.msra.mxu0 0.0
    %984 = vmatprep.mubr.f32.mxu0 0.0
    %985 = vmatmul.mubr.f32.gmra.mxu0 %v843
    %v986 = vpop.f32.mrf.mxu0
    %v987 = vadd.f32 0.0, %v986
    %v988 = vpop.f32.mrf.mxu0
    %v989 = vadd.f32 0.0, %v988
    %990 = vdwg.mxu0
    %v991 = vadd.f32 %v845, %v916
    %v992 = vadd.f32 %v846, %v918
    %v993 = vadd.f32 %v847, %v987
    %v994 = vadd.f32 %v848, %v989
    %v995 = vxor.u32 %v991, 2147483648
    %v996 = vmul.f32 %v995, 1.442695
    %v997 = vpow.pop %v996
    %v998 = vadd.f32 %v997, 1.0
    %v999 = vrcp.pop %v998
    %v1000 = vmul.f32 1.0, %v999
    %v1001 = vxor.u32 %v992, 2147483648
    %v1002 = vmul.f32 %v1001, 1.442695
    %v1003 = vpow.pop %v1002
    %v1004 = vadd.f32 %v1003, 1.0
    %v1005 = vrcp.pop %v1004
    %v1006 = vmul.f32 1.0, %v1005
    %v1007 = vtanh.pop %v993
    %v1008 = vxor.u32 %v994, 2147483648
    %v1009 = vmul.f32 %v1008, 1.442695
    %v1010 = vpow.pop %v1009
    %v1011 = vadd.f32 %v1010, 1.0
    %v1012 = vrcp.pop %v1011
    %v1013 = vmul.f32 1.0, %v1012
    %v1014 = vmul.f32 %v1006, %v841
    %v1015 = vmul.f32 %v1000, %v1007
    %v1016 = vadd.f32 %v1014, %v1015
    %v1017 = vtanh.pop %v1016
    %v1018 = vmul.f32 %v1013, %v1017
    %s1019 = scalar_lea.vmem [#allocation2], 128
    %v1020 = vld [vmem:[%s1019] sm:$0xff]
    %v1021 = vld [vmem:[%s1019 + $0x8] sm:$0xff]
    %v1022 = vld [vmem:[%s1019 + $0x10] sm:$0xff]
    %v1023 = vld [vmem:[%s1019 + $0x18] sm:$0xff]
    %1024 = vmatprep.subr.mxu0 %v496
    %1025 = vmatpush1.msra.mxu0 %v495
    %1026 = vmatprep.subr.mxu0 %v492
    %1027 = vmatpush1.msra.mxu0 %v491
    %1028 = vmatprep.subr.mxu0 %v488
    %1029 = vmatpush1.msra.mxu0 %v487
    %1030 = vmatprep.subr.mxu0 %v484
    %1031 = vmatpush1.msra.mxu0 %v483
    %1032 = vmatprep.subr.mxu0 %v480
    %1033 = vmatpush1.msra.mxu0 %v479
    %1034 = vmatprep.subr.mxu0 %v476
    %1035 = vmatpush1.msra.mxu0 %v475
    %1036 = vmatprep.subr.mxu0 %v472
    %1037 = vmatpush1.msra.mxu0 %v471
    %1038 = vmatprep.subr.mxu0 %v468
    %1039 = vmatpush1.msra.mxu0 %v467
    %1040 = vmatprep.subr.mxu0 %v464
    %1041 = vmatpush1.msra.mxu0 %v463
    %1042 = vmatprep.subr.mxu0 %v460
    %1043 = vmatpush1.msra.mxu0 %v459
    %1044 = vmatprep.subr.mxu0 %v456
    %1045 = vmatpush1.msra.mxu0 %v455
    %1046 = vmatprep.subr.mxu0 %v452
    %1047 = vmatpush1.msra.mxu0 %v451
    %1048 = vmatprep.subr.mxu0 %v448
    %1049 = vmatpush1.msra.mxu0 %v447
    %1050 = vmatprep.subr.mxu0 %v444
    %1051 = vmatpush1.msra.mxu0 %v443
    %1052 = vmatprep.subr.mxu0 %v440
    %1053 = vmatpush1.msra.mxu0 %v439
    %1054 = vmatprep.subr.mxu0 %v436
    %1055 = vmatpush1.msra.mxu0 %v435
    %1056 = vmatprep.subr.mxu0 0.0
    %1057 = vmatpush2.msra.mxu0 0.0
    %1058 = vmatprep.subr.mxu0 0.0
    %1059 = vmatpush2.msra.mxu0 0.0
    %1060 = vmatprep.subr.mxu0 0.0
    %1061 = vmatpush2.msra.mxu0 0.0
    %1062 = vmatprep.subr.mxu0 0.0
    %1063 = vmatpush2.msra.mxu0 0.0
    %1064 = vmatprep.subr.mxu0 0.0
    %1065 = vmatpush2.msra.mxu0 0.0
    %1066 = vmatprep.subr.mxu0 0.0
    %1067 = vmatpush2.msra.mxu0 0.0
    %1068 = vmatprep.subr.mxu0 0.0
    %1069 = vmatpush2.msra.mxu0 0.0
    %1070 = vmatprep.subr.mxu0 0.0
    %1071 = vmatpush2.msra.mxu0 0.0
    %1072 = vmatprep.subr.mxu0 0.0
    %1073 = vmatpush2.msra.mxu0 0.0
    %1074 = vmatprep.subr.mxu0 0.0
    %1075 = vmatpush2.msra.mxu0 0.0
    %1076 = vmatprep.subr.mxu0 0.0
    %1077 = vmatpush2.msra.mxu0 0.0
    %1078 = vmatprep.subr.mxu0 0.0
    %1079 = vmatpush2.msra.mxu0 0.0
    %1080 = vmatprep.subr.mxu0 0.0
    %1081 = vmatpush2.msra.mxu0 0.0
    %1082 = vmatprep.subr.mxu0 0.0
    %1083 = vmatpush2.msra.mxu0 0.0
    %1084 = vmatprep.subr.mxu0 0.0
    %1085 = vmatpush2.msra.mxu0 0.0
    %1086 = vmatprep.subr.mxu0 0.0
    %1087 = vmatpush2.msra.mxu0 0.0
    %1088 = vmatprep.mubr.f32.mxu0 0.0
    %1089 = vmatmul.mubr.f32.gmra.mxu0 %v1018
    %v1090 = vpop.f32.mrf.mxu0
    %v1091 = vadd.f32 0.0, %v1090
    %v1092 = vpop.f32.mrf.mxu0
    %v1093 = vadd.f32 0.0, %v1092
    %1094 = vdwg.mxu0
    %1095 = vmatprep.subr.mxu0 %v498
    %1096 = vmatpush1.msra.mxu0 %v497
    %1097 = vmatprep.subr.mxu0 %v494
    %1098 = vmatpush1.msra.mxu0 %v493
    %1099 = vmatprep.subr.mxu0 %v490
    %1100 = vmatpush1.msra.mxu0 %v489
    %1101 = vmatprep.subr.mxu0 %v486
    %1102 = vmatpush1.msra.mxu0 %v485
    %1103 = vmatprep.subr.mxu0 %v482
    %1104 = vmatpush1.msra.mxu0 %v481
    %1105 = vmatprep.subr.mxu0 %v478
    %1106 = vmatpush1.msra.mxu0 %v477
    %1107 = vmatprep.subr.mxu0 %v474
    %1108 = vmatpush1.msra.mxu0 %v473
    %1109 = vmatprep.subr.mxu0 %v470
    %1110 = vmatpush1.msra.mxu0 %v469
    %1111 = vmatprep.subr.mxu0 %v466
    %1112 = vmatpush1.msra.mxu0 %v465
    %1113 = vmatprep.subr.mxu0 %v462
    %1114 = vmatpush1.msra.mxu0 %v461
    %1115 = vmatprep.subr.mxu0 %v458
    %1116 = vmatpush1.msra.mxu0 %v457
    %1117 = vmatprep.subr.mxu0 %v454
    %1118 = vmatpush1.msra.mxu0 %v453
    %1119 = vmatprep.subr.mxu0 %v450
    %1120 = vmatpush1.msra.mxu0 %v449
    %1121 = vmatprep.subr.mxu0 %v446
    %1122 = vmatpush1.msra.mxu0 %v445
    %1123 = vmatprep.subr.mxu0 %v442
    %1124 = vmatpush1.msra.mxu0 %v441
    %1125 = vmatprep.subr.mxu0 %v438
    %1126 = vmatpush1.msra.mxu0 %v437
    %1127 = vmatprep.subr.mxu0 0.0
    %1128 = vmatpush2.msra.mxu0 0.0
    %1129 = vmatprep.subr.mxu0 0.0
    %1130 = vmatpush2.msra.mxu0 0.0
    %1131 = vmatprep.subr.mxu0 0.0
    %1132 = vmatpush2.msra.mxu0 0.0
    %1133 = vmatprep.subr.mxu0 0.0
    %1134 = vmatpush2.msra.mxu0 0.0
    %1135 = vmatprep.subr.mxu0 0.0
    %1136 = vmatpush2.msra.mxu0 0.0
    %1137 = vmatprep.subr.mxu0 0.0
    %1138 = vmatpush2.msra.mxu0 0.0
    %1139 = vmatprep.subr.mxu0 0.0
    %1140 = vmatpush2.msra.mxu0 0.0
    %1141 = vmatprep.subr.mxu0 0.0
    %1142 = vmatpush2.msra.mxu0 0.0
    %1143 = vmatprep.subr.mxu0 0.0
    %1144 = vmatpush2.msra.mxu0 0.0
    %1145 = vmatprep.subr.mxu0 0.0
    %1146 = vmatpush2.msra.mxu0 0.0
    %1147 = vmatprep.subr.mxu0 0.0
    %1148 = vmatpush2.msra.mxu0 0.0
    %1149 = vmatprep.subr.mxu0 0.0
    %1150 = vmatpush2.msra.mxu0 0.0
    %1151 = vmatprep.subr.mxu0 0.0
    %1152 = vmatpush2.msra.mxu0 0.0
    %1153 = vmatprep.subr.mxu0 0.0
    %1154 = vmatpush2.msra.mxu0 0.0
    %1155 = vmatprep.subr.mxu0 0.0
    %1156 = vmatpush2.msra.mxu0 0.0
    %1157 = vmatprep.subr.mxu0 0.0
    %1158 = vmatpush2.msra.mxu0 0.0
    %1159 = vmatprep.mubr.f32.mxu0 0.0
    %1160 = vmatmul.mubr.f32.gmra.mxu0 %v1018
    %v1161 = vpop.f32.mrf.mxu0
    %v1162 = vadd.f32 0.0, %v1161
    %v1163 = vpop.f32.mrf.mxu0
    %v1164 = vadd.f32 0.0, %v1163
    %1165 = vdwg.mxu0
    %v1166 = vadd.f32 %v1020, %v1091
    %v1167 = vadd.f32 %v1021, %v1093
    %v1168 = vadd.f32 %v1022, %v1162
    %v1169 = vadd.f32 %v1023, %v1164
    %v1170 = vxor.u32 %v1166, 2147483648
    %v1171 = vmul.f32 %v1170, 1.442695
    %v1172 = vpow.pop %v1171
    %v1173 = vadd.f32 %v1172, 1.0
    %v1174 = vrcp.pop %v1173
    %v1175 = vmul.f32 1.0, %v1174
    %v1176 = vxor.u32 %v1167, 2147483648
    %v1177 = vmul.f32 %v1176, 1.442695
    %v1178 = vpow.pop %v1177
    %v1179 = vadd.f32 %v1178, 1.0
    %v1180 = vrcp.pop %v1179
    %v1181 = vmul.f32 1.0, %v1180
    %v1182 = vtanh.pop %v1168
    %v1183 = vxor.u32 %v1169, 2147483648
    %v1184 = vmul.f32 %v1183, 1.442695
    %v1185 = vpow.pop %v1184
    %v1186 = vadd.f32 %v1185, 1.0
    %v1187 = vrcp.pop %v1186
    %v1188 = vmul.f32 1.0, %v1187
    %v1189 = vmul.f32 %v1181, %v1016
    %v1190 = vmul.f32 %v1175, %v1182
    %v1191 = vadd.f32 %v1189, %v1190
    %v1192 = vtanh.pop %v1191
    %v1193 = vmul.f32 %v1188, %v1192
    %s1194 = scalar_lea.vmem [#allocation2], 96
    %v1195 = vld [vmem:[%s1194] sm:$0xff]
    %v1196 = vld [vmem:[%s1194 + $0x8] sm:$0xff]
    %v1197 = vld [vmem:[%s1194 + $0x10] sm:$0xff]
    %v1198 = vld [vmem:[%s1194 + $0x18] sm:$0xff]
    %1199 = vmatprep.subr.mxu0 %v496
    %1200 = vmatpush1.msra.mxu0 %v495
    %1201 = vmatprep.subr.mxu0 %v492
    %1202 = vmatpush1.msra.mxu0 %v491
    %1203 = vmatprep.subr.mxu0 %v488
    %1204 = vmatpush1.msra.mxu0 %v487
    %1205 = vmatprep.subr.mxu0 %v484
    %1206 = vmatpush1.msra.mxu0 %v483
    %1207 = vmatprep.subr.mxu0 %v480
    %1208 = vmatpush1.msra.mxu0 %v479
    %1209 = vmatprep.subr.mxu0 %v476
    %1210 = vmatpush1.msra.mxu0 %v475
    %1211 = vmatprep.subr.mxu0 %v472
    %1212 = vmatpush1.msra.mxu0 %v471
    %1213 = vmatprep.subr.mxu0 %v468
    %1214 = vmatpush1.msra.mxu0 %v467
    %1215 = vmatprep.subr.mxu0 %v464
    %1216 = vmatpush1.msra.mxu0 %v463
    %1217 = vmatprep.subr.mxu0 %v460
    %1218 = vmatpush1.msra.mxu0 %v459
    %1219 = vmatprep.subr.mxu0 %v456
    %1220 = vmatpush1.msra.mxu0 %v455
    %1221 = vmatprep.subr.mxu0 %v452
    %1222 = vmatpush1.msra.mxu0 %v451
    %1223 = vmatprep.subr.mxu0 %v448
    %1224 = vmatpush1.msra.mxu0 %v447
    %1225 = vmatprep.subr.mxu0 %v444
    %1226 = vmatpush1.msra.mxu0 %v443
    %1227 = vmatprep.subr.mxu0 %v440
    %1228 = vmatpush1.msra.mxu0 %v439
    %1229 = vmatprep.subr.mxu0 %v436
    %1230 = vmatpush1.msra.mxu0 %v435
    %1231 = vmatprep.subr.mxu0 0.0
    %1232 = vmatpush2.msra.mxu0 0.0
    %1233 = vmatprep.subr.mxu0 0.0
    %1234 = vmatpush2.msra.mxu0 0.0
    %1235 = vmatprep.subr.mxu0 0.0
    %1236 = vmatpush2.msra.mxu0 0.0
    %1237 = vmatprep.subr.mxu0 0.0
    %1238 = vmatpush2.msra.mxu0 0.0
    %1239 = vmatprep.subr.mxu0 0.0
    %1240 = vmatpush2.msra.mxu0 0.0
    %1241 = vmatprep.subr.mxu0 0.0
    %1242 = vmatpush2.msra.mxu0 0.0
    %1243 = vmatprep.subr.mxu0 0.0
    %1244 = vmatpush2.msra.mxu0 0.0
    %1245 = vmatprep.subr.mxu0 0.0
    %1246 = vmatpush2.msra.mxu0 0.0
    %1247 = vmatprep.subr.mxu0 0.0
    %1248 = vmatpush2.msra.mxu0 0.0
    %1249 = vmatprep.subr.mxu0 0.0
    %1250 = vmatpush2.msra.mxu0 0.0
    %1251 = vmatprep.subr.mxu0 0.0
    %1252 = vmatpush2.msra.mxu0 0.0
    %1253 = vmatprep.subr.mxu0 0.0
    %1254 = vmatpush2.msra.mxu0 0.0
    %1255 = vmatprep.subr.mxu0 0.0
    %1256 = vmatpush2.msra.mxu0 0.0
    %1257 = vmatprep.subr.mxu0 0.0
    %1258 = vmatpush2.msra.mxu0 0.0
    %1259 = vmatprep.subr.mxu0 0.0
    %1260 = vmatpush2.msra.mxu0 0.0
    %1261 = vmatprep.subr.mxu0 0.0
    %1262 = vmatpush2.msra.mxu0 0.0
    %1263 = vmatprep.mubr.f32.mxu0 0.0
    %1264 = vmatmul.mubr.f32.gmra.mxu0 %v1193
    %v1265 = vpop.f32.mrf.mxu0
    %v1266 = vadd.f32 0.0, %v1265
    %v1267 = vpop.f32.mrf.mxu0
    %v1268 = vadd.f32 0.0, %v1267
    %1269 = vdwg.mxu0
    %1270 = vmatprep.subr.mxu0 %v498
    %1271 = vmatpush1.msra.mxu0 %v497
    %1272 = vmatprep.subr.mxu0 %v494
    %1273 = vmatpush1.msra.mxu0 %v493
    %1274 = vmatprep.subr.mxu0 %v490
    %1275 = vmatpush1.msra.mxu0 %v489
    %1276 = vmatprep.subr.mxu0 %v486
    %1277 = vmatpush1.msra.mxu0 %v485
    %1278 = vmatprep.subr.mxu0 %v482
    %1279 = vmatpush1.msra.mxu0 %v481
    %1280 = vmatprep.subr.mxu0 %v478
    %1281 = vmatpush1.msra.mxu0 %v477
    %1282 = vmatprep.subr.mxu0 %v474
    %1283 = vmatpush1.msra.mxu0 %v473
    %1284 = vmatprep.subr.mxu0 %v470
    %1285 = vmatpush1.msra.mxu0 %v469
    %1286 = vmatprep.subr.mxu0 %v466
    %1287 = vmatpush1.msra.mxu0 %v465
    %1288 = vmatprep.subr.mxu0 %v462
    %1289 = vmatpush1.msra.mxu0 %v461
    %1290 = vmatprep.subr.mxu0 %v458
    %1291 = vmatpush1.msra.mxu0 %v457
    %1292 = vmatprep.subr.mxu0 %v454
    %1293 = vmatpush1.msra.mxu0 %v453
    %1294 = vmatprep.subr.mxu0 %v450
    %1295 = vmatpush1.msra.mxu0 %v449
    %1296 = vmatprep.subr.mxu0 %v446
    %1297 = vmatpush1.msra.mxu0 %v445
    %1298 = vmatprep.subr.mxu0 %v442
    %1299 = vmatpush1.msra.mxu0 %v441
    %1300 = vmatprep.subr.mxu0 %v438
    %1301 = vmatpush1.msra.mxu0 %v437
    %1302 = vmatprep.subr.mxu0 0.0
    %1303 = vmatpush2.msra.mxu0 0.0
    %1304 = vmatprep.subr.mxu0 0.0
    %1305 = vmatpush2.msra.mxu0 0.0
    %1306 = vmatprep.subr.mxu0 0.0
    %1307 = vmatpush2.msra.mxu0 0.0
    %1308 = vmatprep.subr.mxu0 0.0
    %1309 = vmatpush2.msra.mxu0 0.0
    %1310 = vmatprep.subr.mxu0 0.0
    %1311 = vmatpush2.msra.mxu0 0.0
    %1312 = vmatprep.subr.mxu0 0.0
    %1313 = vmatpush2.msra.mxu0 0.0
    %1314 = vmatprep.subr.mxu0 0.0
    %1315 = vmatpush2.msra.mxu0 0.0
    %1316 = vmatprep.subr.mxu0 0.0
    %1317 = vmatpush2.msra.mxu0 0.0
    %1318 = vmatprep.subr.mxu0 0.0
    %1319 = vmatpush2.msra.mxu0 0.0
    %1320 = vmatprep.subr.mxu0 0.0
    %1321 = vmatpush2.msra.mxu0 0.0
    %1322 = vmatprep.subr.mxu0 0.0
    %1323 = vmatpush2.msra.mxu0 0.0
    %1324 = vmatprep.subr.mxu0 0.0
    %1325 = vmatpush2.msra.mxu0 0.0
    %1326 = vmatprep.subr.mxu0 0.0
    %1327 = vmatpush2.msra.mxu0 0.0
    %1328 = vmatprep.subr.mxu0 0.0
    %1329 = vmatpush2.msra.mxu0 0.0
    %1330 = vmatprep.subr.mxu0 0.0
    %1331 = vmatpush2.msra.mxu0 0.0
    %1332 = vmatprep.subr.mxu0 0.0
    %1333 = vmatpush2.msra.mxu0 0.0
    %1334 = vmatprep.mubr.f32.mxu0 0.0
    %1335 = vmatmul.mubr.f32.gmra.mxu0 %v1193
    %v1336 = vpop.f32.mrf.mxu0
    %v1337 = vadd.f32 0.0, %v1336
    %v1338 = vpop.f32.mrf.mxu0
    %v1339 = vadd.f32 0.0, %v1338
    %1340 = vdwg.mxu0
    %v1341 = vadd.f32 %v1195, %v1266
    %v1342 = vadd.f32 %v1196, %v1268
    %v1343 = vadd.f32 %v1197, %v1337
    %v1344 = vadd.f32 %v1198, %v1339
    %v1345 = vxor.u32 %v1341, 2147483648
    %v1346 = vmul.f32 %v1345, 1.442695
    %v1347 = vpow.pop %v1346
    %v1348 = vadd.f32 %v1347, 1.0
    %v1349 = vrcp.pop %v1348
    %v1350 = vmul.f32 1.0, %v1349
    %v1351 = vxor.u32 %v1342, 2147483648
    %v1352 = vmul.f32 %v1351, 1.442695
    %v1353 = vpow.pop %v1352
    %v1354 = vadd.f32 %v1353, 1.0
    %v1355 = vrcp.pop %v1354
    %v1356 = vmul.f32 1.0, %v1355
    %v1357 = vtanh.pop %v1343
    %v1358 = vxor.u32 %v1344, 2147483648
    %v1359 = vmul.f32 %v1358, 1.442695
    %v1360 = vpow.pop %v1359
    %v1361 = vadd.f32 %v1360, 1.0
    %v1362 = vrcp.pop %v1361
    %v1363 = vmul.f32 1.0, %v1362
    %v1364 = vmul.f32 %v1356, %v1191
    %v1365 = vmul.f32 %v1350, %v1357
    %v1366 = vadd.f32 %v1364, %v1365
    %v1367 = vtanh.pop %v1366
    %v1368 = vmul.f32 %v1363, %v1367
    %s1369 = scalar_lea.vmem [#allocation2], 64
    %v1370 = vld [vmem:[%s1369] sm:$0xff]
    %v1371 = vld [vmem:[%s1369 + $0x8] sm:$0xff]
    %v1372 = vld [vmem:[%s1369 + $0x10] sm:$0xff]
    %v1373 = vld [vmem:[%s1369 + $0x18] sm:$0xff]
    %1374 = vmatprep.subr.mxu0 %v496
    %1375 = vmatpush1.msra.mxu0 %v495
    %1376 = vmatprep.subr.mxu0 %v492
    %1377 = vmatpush1.msra.mxu0 %v491
    %1378 = vmatprep.subr.mxu0 %v488
    %1379 = vmatpush1.msra.mxu0 %v487
    %1380 = vmatprep.subr.mxu0 %v484
    %1381 = vmatpush1.msra.mxu0 %v483
    %1382 = vmatprep.subr.mxu0 %v480
    %1383 = vmatpush1.msra.mxu0 %v479
    %1384 = vmatprep.subr.mxu0 %v476
    %1385 = vmatpush1.msra.mxu0 %v475
    %1386 = vmatprep.subr.mxu0 %v472
    %1387 = vmatpush1.msra.mxu0 %v471
    %1388 = vmatprep.subr.mxu0 %v468
    %1389 = vmatpush1.msra.mxu0 %v467
    %1390 = vmatprep.subr.mxu0 %v464
    %1391 = vmatpush1.msra.mxu0 %v463
    %1392 = vmatprep.subr.mxu0 %v460
    %1393 = vmatpush1.msra.mxu0 %v459
    %1394 = vmatprep.subr.mxu0 %v456
    %1395 = vmatpush1.msra.mxu0 %v455
    %1396 = vmatprep.subr.mxu0 %v452
    %1397 = vmatpush1.msra.mxu0 %v451
    %1398 = vmatprep.subr.mxu0 %v448
    %1399 = vmatpush1.msra.mxu0 %v447
    %1400 = vmatprep.subr.mxu0 %v444
    %1401 = vmatpush1.msra.mxu0 %v443
    %1402 = vmatprep.subr.mxu0 %v440
    %1403 = vmatpush1.msra.mxu0 %v439
    %1404 = vmatprep.subr.mxu0 %v436
    %1405 = vmatpush1.msra.mxu0 %v435
    %1406 = vmatprep.subr.mxu0 0.0
    %1407 = vmatpush2.msra.mxu0 0.0
    %1408 = vmatprep.subr.mxu0 0.0
    %1409 = vmatpush2.msra.mxu0 0.0
    %1410 = vmatprep.subr.mxu0 0.0
    %1411 = vmatpush2.msra.mxu0 0.0
    %1412 = vmatprep.subr.mxu0 0.0
    %1413 = vmatpush2.msra.mxu0 0.0
    %1414 = vmatprep.subr.mxu0 0.0
    %1415 = vmatpush2.msra.mxu0 0.0
    %1416 = vmatprep.subr.mxu0 0.0
    %1417 = vmatpush2.msra.mxu0 0.0
    %1418 = vmatprep.subr.mxu0 0.0
    %1419 = vmatpush2.msra.mxu0 0.0
    %1420 = vmatprep.subr.mxu0 0.0
    %1421 = vmatpush2.msra.mxu0 0.0
    %1422 = vmatprep.subr.mxu0 0.0
    %1423 = vmatpush2.msra.mxu0 0.0
    %1424 = vmatprep.subr.mxu0 0.0
    %1425 = vmatpush2.msra.mxu0 0.0
    %1426 = vmatprep.subr.mxu0 0.0
    %1427 = vmatpush2.msra.mxu0 0.0
    %1428 = vmatprep.subr.mxu0 0.0
    %1429 = vmatpush2.msra.mxu0 0.0
    %1430 = vmatprep.subr.mxu0 0.0
    %1431 = vmatpush2.msra.mxu0 0.0
    %1432 = vmatprep.subr.mxu0 0.0
    %1433 = vmatpush2.msra.mxu0 0.0
    %1434 = vmatprep.subr.mxu0 0.0
    %1435 = vmatpush2.msra.mxu0 0.0
    %1436 = vmatprep.subr.mxu0 0.0
    %1437 = vmatpush2.msra.mxu0 0.0
    %1438 = vmatprep.mubr.f32.mxu0 0.0
    %1439 = vmatmul.mubr.f32.gmra.mxu0 %v1368
    %v1440 = vpop.f32.mrf.mxu0
    %v1441 = vadd.f32 0.0, %v1440
    %v1442 = vpop.f32.mrf.mxu0
    %v1443 = vadd.f32 0.0, %v1442
    %1444 = vdwg.mxu0
    %1445 = vmatprep.subr.mxu0 %v498
    %1446 = vmatpush1.msra.mxu0 %v497
    %1447 = vmatprep.subr.mxu0 %v494
    %1448 = vmatpush1.msra.mxu0 %v493
    %1449 = vmatprep.subr.mxu0 %v490
    %1450 = vmatpush1.msra.mxu0 %v489
    %1451 = vmatprep.subr.mxu0 %v486
    %1452 = vmatpush1.msra.mxu0 %v485
    %1453 = vmatprep.subr.mxu0 %v482
    %1454 = vmatpush1.msra.mxu0 %v481
    %1455 = vmatprep.subr.mxu0 %v478
    %1456 = vmatpush1.msra.mxu0 %v477
    %1457 = vmatprep.subr.mxu0 %v474
    %1458 = vmatpush1.msra.mxu0 %v473
    %1459 = vmatprep.subr.mxu0 %v470
    %1460 = vmatpush1.msra.mxu0 %v469
    %1461 = vmatprep.subr.mxu0 %v466
    %1462 = vmatpush1.msra.mxu0 %v465
    %1463 = vmatprep.subr.mxu0 %v462
    %1464 = vmatpush1.msra.mxu0 %v461
    %1465 = vmatprep.subr.mxu0 %v458
    %1466 = vmatpush1.msra.mxu0 %v457
    %1467 = vmatprep.subr.mxu0 %v454
    %1468 = vmatpush1.msra.mxu0 %v453
    %1469 = vmatprep.subr.mxu0 %v450
    %1470 = vmatpush1.msra.mxu0 %v449
    %1471 = vmatprep.subr.mxu0 %v446
    %1472 = vmatpush1.msra.mxu0 %v445
    %1473 = vmatprep.subr.mxu0 %v442
    %1474 = vmatpush1.msra.mxu0 %v441
    %1475 = vmatprep.subr.mxu0 %v438
    %1476 = vmatpush1.msra.mxu0 %v437
    %1477 = vmatprep.subr.mxu0 0.0
    %1478 = vmatpush2.msra.mxu0 0.0
    %1479 = vmatprep.subr.mxu0 0.0
    %1480 = vmatpush2.msra.mxu0 0.0
    %1481 = vmatprep.subr.mxu0 0.0
    %1482 = vmatpush2.msra.mxu0 0.0
    %1483 = vmatprep.subr.mxu0 0.0
    %1484 = vmatpush2.msra.mxu0 0.0
    %1485 = vmatprep.subr.mxu0 0.0
    %1486 = vmatpush2.msra.mxu0 0.0
    %1487 = vmatprep.subr.mxu0 0.0
    %1488 = vmatpush2.msra.mxu0 0.0
    %1489 = vmatprep.subr.mxu0 0.0
    %1490 = vmatpush2.msra.mxu0 0.0
    %1491 = vmatprep.subr.mxu0 0.0
    %1492 = vmatpush2.msra.mxu0 0.0
    %1493 = vmatprep.subr.mxu0 0.0
    %1494 = vmatpush2.msra.mxu0 0.0
    %1495 = vmatprep.subr.mxu0 0.0
    %1496 = vmatpush2.msra.mxu0 0.0
    %1497 = vmatprep.subr.mxu0 0.0
    %1498 = vmatpush2.msra.mxu0 0.0
    %1499 = vmatprep.subr.mxu0 0.0
    %1500 = vmatpush2.msra.mxu0 0.0
    %1501 = vmatprep.subr.mxu0 0.0
    %1502 = vmatpush2.msra.mxu0 0.0
    %1503 = vmatprep.subr.mxu0 0.0
    %1504 = vmatpush2.msra.mxu0 0.0
    %1505 = vmatprep.subr.mxu0 0.0
    %1506 = vmatpush2.msra.mxu0 0.0
    %1507 = vmatprep.subr.mxu0 0.0
    %1508 = vmatpush2.msra.mxu0 0.0
    %1509 = vmatprep.mubr.f32.mxu0 0.0
    %1510 = vmatmul.mubr.f32.gmra.mxu0 %v1368
    %v1511 = vpop.f32.mrf.mxu0
    %v1512 = vadd.f32 0.0, %v1511
    %v1513 = vpop.f32.mrf.mxu0
    %v1514 = vadd.f32 0.0, %v1513
    %1515 = vdwg.mxu0
    %v1516 = vadd.f32 %v1370, %v1441
    %v1517 = vadd.f32 %v1371, %v1443
    %v1518 = vadd.f32 %v1372, %v1512
    %v1519 = vadd.f32 %v1373, %v1514
    %v1520 = vxor.u32 %v1516, 2147483648
    %v1521 = vmul.f32 %v1520, 1.442695
    %v1522 = vpow.pop %v1521
    %v1523 = vadd.f32 %v1522, 1.0
    %v1524 = vrcp.pop %v1523
    %v1525 = vmul.f32 1.0, %v1524
    %v1526 = vxor.u32 %v1517, 2147483648
    %v1527 = vmul.f32 %v1526, 1.442695
    %v1528 = vpow.pop %v1527
    %v1529 = vadd.f32 %v1528, 1.0
    %v1530 = vrcp.pop %v1529
    %v1531 = vmul.f32 1.0, %v1530
    %v1532 = vtanh.pop %v1518
    %v1533 = vxor.u32 %v1519, 2147483648
    %v1534 = vmul.f32 %v1533, 1.442695
    %v1535 = vpow.pop %v1534
    %v1536 = vadd.f32 %v1535, 1.0
    %v1537 = vrcp.pop %v1536
    %v1538 = vmul.f32 1.0, %v1537
    %v1539 = vmul.f32 %v1531, %v1366
    %v1540 = vmul.f32 %v1525, %v1532
    %v1541 = vadd.f32 %v1539, %v1540
    %v1542 = vtanh.pop %v1541
    %v1543 = vmul.f32 %v1538, %v1542
    %s1544 = scalar_lea.vmem [#allocation2], 32
    %v1545 = vld [vmem:[%s1544] sm:$0xff]
    %v1546 = vld [vmem:[%s1544 + $0x8] sm:$0xff]
    %v1547 = vld [vmem:[%s1544 + $0x10] sm:$0xff]
    %v1548 = vld [vmem:[%s1544 + $0x18] sm:$0xff]
    %1549 = vmatprep.subr.mxu0 %v496
    %1550 = vmatpush1.msra.mxu0 %v495
    %1551 = vmatprep.subr.mxu0 %v492
    %1552 = vmatpush1.msra.mxu0 %v491
    %1553 = vmatprep.subr.mxu0 %v488
    %1554 = vmatpush1.msra.mxu0 %v487
    %1555 = vmatprep.subr.mxu0 %v484
    %1556 = vmatpush1.msra.mxu0 %v483
    %1557 = vmatprep.subr.mxu0 %v480
    %1558 = vmatpush1.msra.mxu0 %v479
    %1559 = vmatprep.subr.mxu0 %v476
    %1560 = vmatpush1.msra.mxu0 %v475
    %1561 = vmatprep.subr.mxu0 %v472
    %1562 = vmatpush1.msra.mxu0 %v471
    %1563 = vmatprep.subr.mxu0 %v468
    %1564 = vmatpush1.msra.mxu0 %v467
    %1565 = vmatprep.subr.mxu0 %v464
    %1566 = vmatpush1.msra.mxu0 %v463
    %1567 = vmatprep.subr.mxu0 %v460
    %1568 = vmatpush1.msra.mxu0 %v459
    %1569 = vmatprep.subr.mxu0 %v456
    %1570 = vmatpush1.msra.mxu0 %v455
    %1571 = vmatprep.subr.mxu0 %v452
    %1572 = vmatpush1.msra.mxu0 %v451
    %1573 = vmatprep.subr.mxu0 %v448
    %1574 = vmatpush1.msra.mxu0 %v447
    %1575 = vmatprep.subr.mxu0 %v444
    %1576 = vmatpush1.msra.mxu0 %v443
    %1577 = vmatprep.subr.mxu0 %v440
    %1578 = vmatpush1.msra.mxu0 %v439
    %1579 = vmatprep.subr.mxu0 %v436
    %1580 = vmatpush1.msra.mxu0 %v435
    %1581 = vmatprep.subr.mxu0 0.0
    %1582 = vmatpush2.msra.mxu0 0.0
    %1583 = vmatprep.subr.mxu0 0.0
    %1584 = vmatpush2.msra.mxu0 0.0
    %1585 = vmatprep.subr.mxu0 0.0
    %1586 = vmatpush2.msra.mxu0 0.0
    %1587 = vmatprep.subr.mxu0 0.0
    %1588 = vmatpush2.msra.mxu0 0.0
    %1589 = vmatprep.subr.mxu0 0.0
    %1590 = vmatpush2.msra.mxu0 0.0
    %1591 = vmatprep.subr.mxu0 0.0
    %1592 = vmatpush2.msra.mxu0 0.0
    %1593 = vmatprep.subr.mxu0 0.0
    %1594 = vmatpush2.msra.mxu0 0.0
    %1595 = vmatprep.subr.mxu0 0.0
    %1596 = vmatpush2.msra.mxu0 0.0
    %1597 = vmatprep.subr.mxu0 0.0
    %1598 = vmatpush2.msra.mxu0 0.0
    %1599 = vmatprep.subr.mxu0 0.0
    %1600 = vmatpush2.msra.mxu0 0.0
    %1601 = vmatprep.subr.mxu0 0.0
    %1602 = vmatpush2.msra.mxu0 0.0
    %1603 = vmatprep.subr.mxu0 0.0
    %1604 = vmatpush2.msra.mxu0 0.0
    %1605 = vmatprep.subr.mxu0 0.0
    %1606 = vmatpush2.msra.mxu0 0.0
    %1607 = vmatprep.subr.mxu0 0.0
    %1608 = vmatpush2.msra.mxu0 0.0
    %1609 = vmatprep.subr.mxu0 0.0
    %1610 = vmatpush2.msra.mxu0 0.0
    %1611 = vmatprep.subr.mxu0 0.0
    %1612 = vmatpush2.msra.mxu0 0.0
    %1613 = vmatprep.mubr.f32.mxu0 0.0
    %1614 = vmatmul.mubr.f32.gmra.mxu0 %v1543
    %v1615 = vpop.f32.mrf.mxu0
    %v1616 = vadd.f32 0.0, %v1615
    %v1617 = vpop.f32.mrf.mxu0
    %v1618 = vadd.f32 0.0, %v1617
    %1619 = vdwg.mxu0
    %1620 = vmatprep.subr.mxu0 %v498
    %1621 = vmatpush1.msra.mxu0 %v497
    %1622 = vmatprep.subr.mxu0 %v494
    %1623 = vmatpush1.msra.mxu0 %v493
    %1624 = vmatprep.subr.mxu0 %v490
    %1625 = vmatpush1.msra.mxu0 %v489
    %1626 = vmatprep.subr.mxu0 %v486
    %1627 = vmatpush1.msra.mxu0 %v485
    %1628 = vmatprep.subr.mxu0 %v482
    %1629 = vmatpush1.msra.mxu0 %v481
    %1630 = vmatprep.subr.mxu0 %v478
    %1631 = vmatpush1.msra.mxu0 %v477
    %1632 = vmatprep.subr.mxu0 %v474
    %1633 = vmatpush1.msra.mxu0 %v473
    %1634 = vmatprep.subr.mxu0 %v470
    %1635 = vmatpush1.msra.mxu0 %v469
    %1636 = vmatprep.subr.mxu0 %v466
    %1637 = vmatpush1.msra.mxu0 %v465
    %1638 = vmatprep.subr.mxu0 %v462
    %1639 = vmatpush1.msra.mxu0 %v461
    %1640 = vmatprep.subr.mxu0 %v458
    %1641 = vmatpush1.msra.mxu0 %v457
    %1642 = vmatprep.subr.mxu0 %v454
    %1643 = vmatpush1.msra.mxu0 %v453
    %1644 = vmatprep.subr.mxu0 %v450
    %1645 = vmatpush1.msra.mxu0 %v449
    %1646 = vmatprep.subr.mxu0 %v446
    %1647 = vmatpush1.msra.mxu0 %v445
    %1648 = vmatprep.subr.mxu0 %v442
    %1649 = vmatpush1.msra.mxu0 %v441
    %1650 = vmatprep.subr.mxu0 %v438
    %1651 = vmatpush1.msra.mxu0 %v437
    %1652 = vmatprep.subr.mxu0 0.0
    %1653 = vmatpush2.msra.mxu0 0.0
    %1654 = vmatprep.subr.mxu0 0.0
    %1655 = vmatpush2.msra.mxu0 0.0
    %1656 = vmatprep.subr.mxu0 0.0
    %1657 = vmatpush2.msra.mxu0 0.0
    %1658 = vmatprep.subr.mxu0 0.0
    %1659 = vmatpush2.msra.mxu0 0.0
    %1660 = vmatprep.subr.mxu0 0.0
    %1661 = vmatpush2.msra.mxu0 0.0
    %1662 = vmatprep.subr.mxu0 0.0
    %1663 = vmatpush2.msra.mxu0 0.0
    %1664 = vmatprep.subr.mxu0 0.0
    %1665 = vmatpush2.msra.mxu0 0.0
    %1666 = vmatprep.subr.mxu0 0.0
    %1667 = vmatpush2.msra.mxu0 0.0
    %1668 = vmatprep.subr.mxu0 0.0
    %1669 = vmatpush2.msra.mxu0 0.0
    %1670 = vmatprep.subr.mxu0 0.0
    %1671 = vmatpush2.msra.mxu0 0.0
    %1672 = vmatprep.subr.mxu0 0.0
    %1673 = vmatpush2.msra.mxu0 0.0
    %1674 = vmatprep.subr.mxu0 0.0
    %1675 = vmatpush2.msra.mxu0 0.0
    %1676 = vmatprep.subr.mxu0 0.0
    %1677 = vmatpush2.msra.mxu0 0.0
    %1678 = vmatprep.subr.mxu0 0.0
    %1679 = vmatpush2.msra.mxu0 0.0
    %1680 = vmatprep.subr.mxu0 0.0
    %1681 = vmatpush2.msra.mxu0 0.0
    %1682 = vmatprep.subr.mxu0 0.0
    %1683 = vmatpush2.msra.mxu0 0.0
    %1684 = vmatprep.mubr.f32.mxu0 0.0
    %1685 = vmatmul.mubr.f32.gmra.mxu0 %v1543
    %v1686 = vpop.f32.mrf.mxu0
    %v1687 = vadd.f32 0.0, %v1686
    %v1688 = vpop.f32.mrf.mxu0
    %v1689 = vadd.f32 0.0, %v1688
    %1690 = vdwg.mxu0
    %v1691 = vadd.f32 %v1545, %v1616
    %v1692 = vadd.f32 %v1546, %v1618
    %v1693 = vadd.f32 %v1547, %v1687
    %v1694 = vadd.f32 %v1548, %v1689
    %v1695 = vxor.u32 %v1691, 2147483648
    %v1696 = vmul.f32 %v1695, 1.442695
    %v1697 = vpow.pop %v1696
    %v1698 = vadd.f32 %v1697, 1.0
    %v1699 = vrcp.pop %v1698
    %v1700 = vmul.f32 1.0, %v1699
    %v1701 = vxor.u32 %v1692, 2147483648
    %v1702 = vmul.f32 %v1701, 1.442695
    %v1703 = vpow.pop %v1702
    %v1704 = vadd.f32 %v1703, 1.0
    %v1705 = vrcp.pop %v1704
    %v1706 = vmul.f32 1.0, %v1705
    %v1707 = vtanh.pop %v1693
    %v1708 = vxor.u32 %v1694, 2147483648
    %v1709 = vmul.f32 %v1708, 1.442695
    %v1710 = vpow.pop %v1709
    %v1711 = vadd.f32 %v1710, 1.0
    %v1712 = vrcp.pop %v1711
    %v1713 = vmul.f32 1.0, %v1712
    %v1714 = vmul.f32 %v1706, %v1541
    %v1715 = vmul.f32 %v1700, %v1707
    %v1716 = vadd.f32 %v1714, %v1715
    %v1717 = vtanh.pop %v1716
    %v1718 = vmul.f32 %v1713, %v1717
    %v1719 = vld [vmem:[#allocation2] sm:$0xff]
    %v1720 = vld [vmem:[#allocation2 + $0x8] sm:$0xff]
    %v1721 = vld [vmem:[#allocation2 + $0x10] sm:$0xff]
    %v1722 = vld [vmem:[#allocation2 + $0x18] sm:$0xff]
    %1723 = vmatprep.subr.mxu0 %v496
    %1724 = vmatpush1.msra.mxu0 %v495
    %1725 = vmatprep.subr.mxu0 %v492
    %1726 = vmatpush1.msra.mxu0 %v491
    %1727 = vmatprep.subr.mxu0 %v488
    %1728 = vmatpush1.msra.mxu0 %v487
    %1729 = vmatprep.subr.mxu0 %v484
    %1730 = vmatpush1.msra.mxu0 %v483
    %1731 = vmatprep.subr.mxu0 %v480
    %1732 = vmatpush1.msra.mxu0 %v479
    %1733 = vmatprep.subr.mxu0 %v476
    %1734 = vmatpush1.msra.mxu0 %v475
    %1735 = vmatprep.subr.mxu0 %v472
    %1736 = vmatpush1.msra.mxu0 %v471
    %1737 = vmatprep.subr.mxu0 %v468
    %1738 = vmatpush1.msra.mxu0 %v467
    %1739 = vmatprep.subr.mxu0 %v464
    %1740 = vmatpush1.msra.mxu0 %v463
    %1741 = vmatprep.subr.mxu0 %v460
    %1742 = vmatpush1.msra.mxu0 %v459
    %1743 = vmatprep.subr.mxu0 %v456
    %1744 = vmatpush1.msra.mxu0 %v455
    %1745 = vmatprep.subr.mxu0 %v452
    %1746 = vmatpush1.msra.mxu0 %v451
    %1747 = vmatprep.subr.mxu0 %v448
    %1748 = vmatpush1.msra.mxu0 %v447
    %1749 = vmatprep.subr.mxu0 %v444
    %1750 = vmatpush1.msra.mxu0 %v443
    %1751 = vmatprep.subr.mxu0 %v440
    %1752 = vmatpush1.msra.mxu0 %v439
    %1753 = vmatprep.subr.mxu0 %v436
    %1754 = vmatpush1.msra.mxu0 %v435
    %1755 = vmatprep.subr.mxu0 0.0
    %1756 = vmatpush2.msra.mxu0 0.0
    %1757 = vmatprep.subr.mxu0 0.0
    %1758 = vmatpush2.msra.mxu0 0.0
    %1759 = vmatprep.subr.mxu0 0.0
    %1760 = vmatpush2.msra.mxu0 0.0
    %1761 = vmatprep.subr.mxu0 0.0
    %1762 = vmatpush2.msra.mxu0 0.0
    %1763 = vmatprep.subr.mxu0 0.0
    %1764 = vmatpush2.msra.mxu0 0.0
    %1765 = vmatprep.subr.mxu0 0.0
    %1766 = vmatpush2.msra.mxu0 0.0
    %1767 = vmatprep.subr.mxu0 0.0
    %1768 = vmatpush2.msra.mxu0 0.0
    %1769 = vmatprep.subr.mxu0 0.0
    %1770 = vmatpush2.msra.mxu0 0.0
    %1771 = vmatprep.subr.mxu0 0.0
    %1772 = vmatpush2.msra.mxu0 0.0
    %1773 = vmatprep.subr.mxu0 0.0
    %1774 = vmatpush2.msra.mxu0 0.0
    %1775 = vmatprep.subr.mxu0 0.0
    %1776 = vmatpush2.msra.mxu0 0.0
    %1777 = vmatprep.subr.mxu0 0.0
    %1778 = vmatpush2.msra.mxu0 0.0
    %1779 = vmatprep.subr.mxu0 0.0
    %1780 = vmatpush2.msra.mxu0 0.0
    %1781 = vmatprep.subr.mxu0 0.0
    %1782 = vmatpush2.msra.mxu0 0.0
    %1783 = vmatprep.subr.mxu0 0.0
    %1784 = vmatpush2.msra.mxu0 0.0
    %1785 = vmatprep.subr.mxu0 0.0
    %1786 = vmatpush2.msra.mxu0 0.0
    %1787 = vmatprep.mubr.f32.mxu0 0.0
    %1788 = vmatmul.mubr.f32.gmra.mxu0 %v1718
    %v1789 = vpop.f32.mrf.mxu0
    %v1790 = vadd.f32 0.0, %v1789
    %v1791 = vpop.f32.mrf.mxu0
    %v1792 = vadd.f32 0.0, %v1791
    %1793 = vdwg.mxu0
    %1794 = vmatprep.subr.mxu0 %v498
    %1795 = vmatpush1.msra.mxu0 %v497
    %1796 = vmatprep.subr.mxu0 %v494
    %1797 = vmatpush1.msra.mxu0 %v493
    %1798 = vmatprep.subr.mxu0 %v490
    %1799 = vmatpush1.msra.mxu0 %v489
    %1800 = vmatprep.subr.mxu0 %v486
    %1801 = vmatpush1.msra.mxu0 %v485
    %1802 = vmatprep.subr.mxu0 %v482
    %1803 = vmatpush1.msra.mxu0 %v481
    %1804 = vmatprep.subr.mxu0 %v478
    %1805 = vmatpush1.msra.mxu0 %v477
    %1806 = vmatprep.subr.mxu0 %v474
    %1807 = vmatpush1.msra.mxu0 %v473
    %1808 = vmatprep.subr.mxu0 %v470
    %1809 = vmatpush1.msra.mxu0 %v469
    %1810 = vmatprep.subr.mxu0 %v466
    %1811 = vmatpush1.msra.mxu0 %v465
    %1812 = vmatprep.subr.mxu0 %v462
    %1813 = vmatpush1.msra.mxu0 %v461
    %1814 = vmatprep.subr.mxu0 %v458
    %1815 = vmatpush1.msra.mxu0 %v457
    %1816 = vmatprep.subr.mxu0 %v454
    %1817 = vmatpush1.msra.mxu0 %v453
    %1818 = vmatprep.subr.mxu0 %v450
    %1819 = vmatpush1.msra.mxu0 %v449
    %1820 = vmatprep.subr.mxu0 %v446
    %1821 = vmatpush1.msra.mxu0 %v445
    %1822 = vmatprep.subr.mxu0 %v442
    %1823 = vmatpush1.msra.mxu0 %v441
    %1824 = vmatprep.subr.mxu0 %v438
    %1825 = vmatpush1.msra.mxu0 %v437
    %1826 = vmatprep.subr.mxu0 0.0
    %1827 = vmatpush2.msra.mxu0 0.0
    %1828 = vmatprep.subr.mxu0 0.0
    %1829 = vmatpush2.msra.mxu0 0.0
    %1830 = vmatprep.subr.mxu0 0.0
    %1831 = vmatpush2.msra.mxu0 0.0
    %1832 = vmatprep.subr.mxu0 0.0
    %1833 = vmatpush2.msra.mxu0 0.0
    %1834 = vmatprep.subr.mxu0 0.0
    %1835 = vmatpush2.msra.mxu0 0.0
    %1836 = vmatprep.subr.mxu0 0.0
    %1837 = vmatpush2.msra.mxu0 0.0
    %1838 = vmatprep.subr.mxu0 0.0
    %1839 = vmatpush2.msra.mxu0 0.0
    %1840 = vmatprep.subr.mxu0 0.0
    %1841 = vmatpush2.msra.mxu0 0.0
    %1842 = vmatprep.subr.mxu0 0.0
    %1843 = vmatpush2.msra.mxu0 0.0
    %1844 = vmatprep.subr.mxu0 0.0
    %1845 = vmatpush2.msra.mxu0 0.0
    %1846 = vmatprep.subr.mxu0 0.0
    %1847 = vmatpush2.msra.mxu0 0.0
    %1848 = vmatprep.subr.mxu0 0.0
    %1849 = vmatpush2.msra.mxu0 0.0
    %1850 = vmatprep.subr.mxu0 0.0
    %1851 = vmatpush2.msra.mxu0 0.0
    %1852 = vmatprep.subr.mxu0 0.0
    %1853 = vmatpush2.msra.mxu0 0.0
    %1854 = vmatprep.subr.mxu0 0.0
    %1855 = vmatpush2.msra.mxu0 0.0
    %1856 = vmatprep.subr.mxu0 0.0
    %1857 = vmatpush2.msra.mxu0 0.0
    %1858 = vmatprep.mubr.f32.mxu0 0.0
    %1859 = vmatmul.mubr.f32.gmra.mxu0 %v1718
    %v1860 = vpop.f32.mrf.mxu0
    %v1861 = vadd.f32 0.0, %v1860
    %v1862 = vpop.f32.mrf.mxu0
    %v1863 = vadd.f32 0.0, %v1862
    %1864 = vdwg.mxu0
    %v1865 = vadd.f32 %v1719, %v1790
    %v1866 = vadd.f32 %v1720, %v1792
    %v1867 = vadd.f32 %v1721, %v1861
    %v1868 = vadd.f32 %v1722, %v1863
    %v1869 = vxor.u32 %v1865, 2147483648
    %v1870 = vmul.f32 %v1869, 1.442695
    %v1871 = vpow.pop %v1870
    %v1872 = vadd.f32 %v1871, 1.0
    %v1873 = vrcp.pop %v1872
    %v1874 = vmul.f32 1.0, %v1873
    %v1875 = vxor.u32 %v1866, 2147483648
    %v1876 = vmul.f32 %v1875, 1.442695
    %v1877 = vpow.pop %v1876
    %v1878 = vadd.f32 %v1877, 1.0
    %v1879 = vrcp.pop %v1878
    %v1880 = vmul.f32 1.0, %v1879
    %v1881 = vtanh.pop %v1867
    %v1882 = vxor.u32 %v1868, 2147483648
    %v1883 = vmul.f32 %v1882, 1.442695
    %v1884 = vpow.pop %v1883
    %v1885 = vadd.f32 %v1884, 1.0
    %v1886 = vrcp.pop %v1885
    %v1887 = vmul.f32 1.0, %v1886
    %v1888 = vmul.f32 %v1880, %v1716
    %v1889 = vmul.f32 %v1874, %v1881
    %v1890 = vadd.f32 %v1888, %v1889
    %v1891 = vtanh.pop %v1890
    %v1892 = vmul.f32 %v1887, %v1891
    %1893 = vst [vmem:[#allocation10] sm:$0xff] %v1892
    // Predicated region
    $region30: #{tpu_custom_call.1} parent=1 // pred_check
      _
    $region31: #{tpu_custom_call.1} parent=1 // pred_check_branch
      %1895 = sbr.rel (0) target = $region33
    $region32: #{tpu_custom_call.1} parent=1 // pred_region
      %s1897 = ssub.s32 1024, 1024
      %1898 = vsyncadd [#allocation5], %s1897
      %s1899 = sshll.u32 [#allocation9], 4
      %s1900 = int_to_ptr.vmem [resolvable:$true] %s1899
      %1905 = dma.vmem_to_hbm [thread:$0]  %s1900, 1024, %s4, [#allocation5], 128, 128, 8
    $region33: #{tpu_custom_call.1} parent=1 // pred_fallthru
      _
    // Predicated region
    $region34: #{tpu_custom_call.1} parent=1 // pred_check
      _
    $region35: #{tpu_custom_call.1} parent=1 // pred_check_branch
      %1907 = sbr.rel (0) target = $region37
    $region36: #{tpu_custom_call.1} parent=1 // pred_region
      %s1909 = ssub.s32 128, 128
      %1910 = vsyncadd [#allocation11], %s1909
      %s1912 = sshll.u32 [#allocation10], 4
      %s1913 = int_to_ptr.vmem [resolvable:$true] %s1912
      %1915 = dma.vmem_to_hbm [thread:$0]  %s1913, 128, %s5, [#allocation11]
    $region37: #{tpu_custom_call.1} parent=1 // pred_fallthru
      _
    // Predicated region
    $region38: #{tpu_custom_call.1} parent=1 // pred_check
      _
    $region39: #{tpu_custom_call.1} parent=1 // pred_check_branch
      %1917 = sbr.rel (0) target = $region41
    $region40: #{tpu_custom_call.1} parent=1 // pred_region
      %1918 = dma.done [#allocation5], 1024
    $region41: #{tpu_custom_call.1} parent=1 // pred_fallthru
      _
    // Predicated region
    $region42: #{tpu_custom_call.1} parent=1 // pred_check
      _
    $region43: #{tpu_custom_call.1} parent=1 // pred_check_branch
      %1920 = sbr.rel (0) target = $region45
    $region44: #{tpu_custom_call.1} parent=1 // pred_region
      %1921 = dma.done [#allocation11], 128
    $region45: #{tpu_custom_call.1} parent=1 // pred_fallthru
      _
    %1922 = vsyncpa [#allocation4], 1
    %1923 = vsyncpa [#allocation7], 1
    %1924 = vsyncpa [#allocation5], 1
    %1925 = vsyncpa [#allocation11], 1

</llo_original>
